<compile_context>
chip_gen: v5e
topology: v5e:2x2
jax: 0.10.0
libtpu: 0.0.40
codegen_flags: <defaults>
</compile_context>

<pallas_src>
import functools

import numpy as np
import jax
import jax.numpy as jnp
from jax.experimental import pallas as pl
from jax.experimental.pallas import tpu as pltpu


def _model_kernel(x_ref,
                  sw1_ref, sb1_ref, sw2_ref, sb2_ref,
                  pw1_ref, pb1_ref, pw2_ref, pb2_ref,
                  pw3_ref, pb3_ref, pw4_ref, pb4_ref,
                  seg_ref, segt_ref, unc_ref,
                  ua_ref, ub_ref, gn_ref,
                  xcf_ref, p_out_ref, w_out_ref,
                  *, inv_tau):
    x = x_ref[...]

    # ---- selector: Linear(D,HS) -> ReLU -> Linear(HS,N) -> Sigmoid ----
    h = jnp.maximum(
        jnp.dot(x, sw1_ref[...], preferred_element_type=jnp.float32) + sb1_ref[...], 0.0)
    logits_p = jnp.dot(h, sw2_ref[...], preferred_element_type=jnp.float32) + sb2_ref[...]
    P = pl.reciprocal(1.0 + jnp.exp(-logits_p), approx=True)
    p_out_ref[...] = P.astype(p_out_ref.dtype)

    # ---- Sample_Bernoulli (training path, simplified gumbel-ratio) ----
    # exp(-log(-log u)) == 1/(-log u); tau cancels in the ratio:
    #   probs = P*b / (P*b + (1-P)*a)  with a = -log(ua), b = -log(ub)
    a = -jnp.log(ua_ref[...])
    b = -jnp.log(ub_ref[...])
    num = P * b
    den = num + (1.0 - P) * a
    probs = num * pl.reciprocal(den, approx=True)

    # ---- Perturber MLP: D -> HP -> HP -> HP -> D with ReLU between ----
    h1 = jnp.maximum(
        jnp.dot(x, pw1_ref[...], preferred_element_type=jnp.float32) + pb1_ref[...], 0.0)
    h2 = jnp.maximum(
        jnp.dot(h1, pw2_ref[...], preferred_element_type=jnp.float32) + pb2_ref[...], 0.0)
    h3 = jnp.maximum(
        jnp.dot(h2, pw3_ref[...], preferred_element_type=jnp.float32) + pb3_ref[...], 0.0)
    W = jnp.dot(h3, pw4_ref[...], preferred_element_type=jnp.float32) + pb4_ref[...]
    w_out_ref[...] = W.astype(w_out_ref.dtype)

    # ---- vectorized per-segment gumbel-softmax + convex mix ----
    # z over the full (bm, D) slab; subtracting the per-row GLOBAL max is a
    # constant shift within every segment, so each segment softmax is unchanged.
    seg = seg_ref[...]      # (D, N) block-diagonal one-hot segment matrix
    segt = segt_ref[...]    # (N, D) its transpose (precomputed, avoids XLU transpose)
    z = (W + gn_ref[...]) * inv_tau
    z = z - jnp.max(z, axis=-1, keepdims=True)
    ez = jnp.exp(z)
    seg_sums = jnp.dot(ez, seg, preferred_element_type=jnp.float32)        # (bm, N)
    den_full = jnp.dot(seg_sums, segt, preferred_element_type=jnp.float32) + unc_ref[...]
    soft = ez * pl.reciprocal(den_full, approx=True)
    p_full = jnp.dot(probs, segt, preferred_element_type=jnp.float32)      # (bm, D)

    # single lane-dense full-width store (no masked partial stores, no stale cols)
    xcf_ref[...] = (p_full * soft + (1.0 - p_full) * x).astype(xcf_ref.dtype)


def model_forward(x, truth_x, params, ua, ub, gn, *, tau, col_ranges, block_b=256):
    """Fused selector / Bernoulli / perturber / categorical-mix forward."""
    B, D = x.shape
    N = len(col_ranges)

    bm = B if B <= block_b else block_b
    assert B % bm == 0, "batch must be divisible by the batch tile"
    grid = (B // bm,)

    # Static block-diagonal segment matrix and its transpose; `unc` makes the
    # softmax denominator safe for any columns not covered by col_ranges
    # (those columns fall through to x since p_full == 0 there).
    seg_np = np.zeros((D, N), dtype=np.float32)
    for i, (s, e) in enumerate(col_ranges):
        seg_np[s:e, i] = 1.0
    segt_np = np.ascontiguousarray(seg_np.T)
    unc_np = (1.0 - seg_np.sum(axis=1))[None, :].astype(np.float32)

    param_list = [params[k] for k in (
        "sw1", "sb1", "sw2", "sb2",
        "pw1", "pb1", "pw2", "pb2", "pw3", "pb3", "pw4", "pb4")]
    const_list = [jnp.asarray(seg_np), jnp.asarray(segt_np), jnp.asarray(unc_np)]
    inputs = [x] + param_list + const_list + [ua, ub, gn]

    def resident(shape):
        return pl.BlockSpec(tuple(shape), lambda i: (0, 0))   # stays in VMEM across steps

    def batched(cols):
        return pl.BlockSpec((bm, cols), lambda i: (i, 0))

    in_specs = ([batched(D)] +
                [resident(p.shape) for p in param_list] +
                [resident(c.shape) for c in const_list] +
                [batched(N), batched(N), batched(D)])
    out_specs = (batched(D), batched(N), batched(D))

    kernel = functools.partial(_model_kernel, inv_tau=float(1.0 / tau))

    xcf, P, W = pl.pallas_call(
        kernel,
        grid=grid,
        out_shape=(
            jax.ShapeDtypeStruct((B, D), jnp.float32),  # xcf
            jax.ShapeDtypeStruct((B, N), jnp.float32),  # P
            jax.ShapeDtypeStruct((B, D), jnp.float32),  # W
        ),
        in_specs=in_specs,
        out_specs=out_specs,
        compiler_params=pltpu.CompilerParams(
            dimension_semantics=("parallel",),
            vmem_limit_bytes=32 * 1024 * 1024),
    )(*inputs)

    # training-mode return signature: (truth_x, xcf, P, W)
    return truth_x, xcf, P, W


def _reference(x, params, ua, ub, gn, tau, col_ranges):
    """Pure-JAX reference matching the PyTorch training-mode math exactly."""
    h = jax.nn.relu(x @ params["sw1"] + params["sb1"])
    P = jax.nn.sigmoid(h @ params["sw2"] + params["sb2"])
    ga = -jnp.log(-jnp.log(ua))
    gb = -jnp.log(-jnp.log(ub))
    no = P * jnp.exp(ga) / tau
    de = no + (1.0 - P) * jnp.exp(gb) / tau
    probs = no / de
    h1 = jax.nn.relu(x @ params["pw1"] + params["pb1"])
    h2 = jax.nn.relu(h1 @ params["pw2"] + params["pb2"])
    h3 = jax.nn.relu(h2 @ params["pw3"] + params["pb3"])
    W = h3 @ params["pw4"] + params["pb4"]
    xcf = jnp.zeros_like(x)
    for i, (s, e) in enumerate(col_ranges):
        soft = jax.nn.softmax((W[:, s:e] + gn[:, s:e]) / tau, axis=-1)
        p_i = probs[:, i:i + 1]
        xcf = xcf.at[:, s:e].set(p_i * soft + (1.0 - p_i) * x[:, s:e])
    return xcf, P, W


def _init_params(key, D, HS, HP, N):
    """Deterministic small-scale init (shapes match the nn.Module __init__)."""
    keys = jax.random.split(key, 12)
    scale = 0.1

    def w(k, shape):
        return (scale * jax.random.normal(k, shape)).astype(jnp.float32)

    return {
        "sw1": w(keys[0], (D, HS)), "sb1": w(keys[1], (1, HS)),
        "sw2": w(keys[2], (HS, N)), "sb2": w(keys[3], (1, N)),
        "pw1": w(keys[4], (D, HP)), "pb1": w(keys[5], (1, HP)),
        "pw2": w(keys[6], (HP, HP)), "pb2": w(keys[7], (1, HP)),
        "pw3": w(keys[8], (HP, HP)), "pb3": w(keys[9], (1, HP)),
        "pw4": w(keys[10], (HP, D)), "pb4": w(keys[11], (1, D)),
    }


if __name__ == "__main__":
    # Small synthetic "data generator" layout: N=4 one-hot columns of width 8 → D=32.
    col_ranges = [(0, 8), (8, 16), (16, 24), (24, 32)]
    N = len(col_ranges)
    B, D, HS, HP = 16, 32, 32, 32
    tau = 0.7

    key = jax.random.PRNGKey(0)
    k_param, k_x, k_ua, k_ub, k_gn = jax.random.split(key, 5)

    params = _init_params(k_param, D, HS, HP, N)

    # One-hot style input x (and truth_x = x) consistent with categorical columns.
    raw = jax.random.normal(k_x, (B, D)).astype(jnp.float32)
    cols = []
    for (s, e) in col_ranges:
        idx = jnp.argmax(raw[:, s:e], axis=-1)
        cols.append(jax.nn.one_hot(idx, e - s, dtype=jnp.float32))
    x = jnp.concatenate(cols, axis=1)
    truth_x = x

    # Randomness consumed by the sampling layers (mirrors torch.rand_like and
    # the gumbel noise inside nn.functional.gumbel_softmax).
    eps = 1e-7
    ua = jax.random.uniform(k_ua, (B, N), minval=eps, maxval=1.0 - eps).astype(jnp.float32)
    ub = jax.random.uniform(k_ub, (B, N), minval=eps, maxval=1.0 - eps).astype(jnp.float32)
    gn = jax.random.gumbel(k_gn, (B, D)).astype(jnp.float32)

    truth_out, xcf, P, W = model_forward(
        x, truth_x, params, ua, ub, gn, tau=tau, col_ranges=col_ranges, block_b=8)
    jax.block_until_ready((truth_out, xcf, P, W))

    assert truth_out.shape == (B, D)
    assert xcf.shape == (B, D)
    assert P.shape == (B, N)
    assert W.shape == (B, D)
    assert bool(jnp.all(jnp.isfinite(xcf)))

    # Parity check against the exact (non-approx) reference math.
    xcf_r, P_r, W_r = _reference(x, params, ua, ub, gn, tau, col_ranges)
    assert bool(jnp.allclose(P, P_r, atol=1e-2, rtol=1e-2))
    assert bool(jnp.allclose(W, W_r, atol=1e-2, rtol=1e-2))
    assert bool(jnp.allclose(xcf, xcf_r, atol=1e-2, rtol=1e-2))

    print("KERNEL_OK")
</pallas_src>

<mosaic_0001>
module attributes {stable_mosaic.version = 11 : i64} {
  func.func @_model_kernel(%arg0: i32, %arg1: memref<8x32xf32, #tpu.memory_space<vmem>>, %arg2: memref<32x32xf32, #tpu.memory_space<vmem>>, %arg3: memref<1x32xf32, #tpu.memory_space<vmem>>, %arg4: memref<32x4xf32, #tpu.memory_space<vmem>>, %arg5: memref<1x4xf32, #tpu.memory_space<vmem>>, %arg6: memref<32x32xf32, #tpu.memory_space<vmem>>, %arg7: memref<1x32xf32, #tpu.memory_space<vmem>>, %arg8: memref<32x32xf32, #tpu.memory_space<vmem>>, %arg9: memref<1x32xf32, #tpu.memory_space<vmem>>, %arg10: memref<32x32xf32, #tpu.memory_space<vmem>>, %arg11: memref<1x32xf32, #tpu.memory_space<vmem>>, %arg12: memref<32x32xf32, #tpu.memory_space<vmem>>, %arg13: memref<1x32xf32, #tpu.memory_space<vmem>>, %arg14: memref<32x4xf32, #tpu.memory_space<vmem>>, %arg15: memref<4x32xf32, #tpu.memory_space<vmem>>, %arg16: memref<1x32xf32, #tpu.memory_space<vmem>>, %arg17: memref<8x4xf32, #tpu.memory_space<vmem>>, %arg18: memref<8x4xf32, #tpu.memory_space<vmem>>, %arg19: memref<8x32xf32, #tpu.memory_space<vmem>>, %arg20: memref<8x32xf32, #tpu.memory_space<vmem>>, %arg21: memref<8x4xf32, #tpu.memory_space<vmem>>, %arg22: memref<8x32xf32, #tpu.memory_space<vmem>>) attributes {dimension_semantics = [#tpu.dimension_semantics<parallel>], iteration_bounds = array<i64: 2>, scalar_prefetch = 0 : i64, scratch_operands = 0 : i64, tpu.core_type = #tpu.core_type<tc>, window_params = [{transform_indices = @transform_0, window_bounds = array<i64: 8, 32>}, {pipeline_mode = #tpu.pipeline_mode<synchronous>, transform_indices = @transform_1, window_bounds = array<i64: 32, 32>}, {pipeline_mode = #tpu.pipeline_mode<synchronous>, transform_indices = @transform_2, window_bounds = array<i64: 1, 32>}, {pipeline_mode = #tpu.pipeline_mode<synchronous>, transform_indices = @transform_3, window_bounds = array<i64: 32, 4>}, {pipeline_mode = #tpu.pipeline_mode<synchronous>, transform_indices = @transform_4, window_bounds = array<i64: 1, 4>}, {pipeline_mode = #tpu.pipeline_mode<synchronous>, transform_indices = @transform_5, window_bounds = array<i64: 32, 32>}, {pipeline_mode = #tpu.pipeline_mode<synchronous>, transform_indices = @transform_6, window_bounds = array<i64: 1, 32>}, {pipeline_mode = #tpu.pipeline_mode<synchronous>, transform_indices = @transform_7, window_bounds = array<i64: 32, 32>}, {pipeline_mode = #tpu.pipeline_mode<synchronous>, transform_indices = @transform_8, window_bounds = array<i64: 1, 32>}, {pipeline_mode = #tpu.pipeline_mode<synchronous>, transform_indices = @transform_9, window_bounds = array<i64: 32, 32>}, {pipeline_mode = #tpu.pipeline_mode<synchronous>, transform_indices = @transform_10, window_bounds = array<i64: 1, 32>}, {pipeline_mode = #tpu.pipeline_mode<synchronous>, transform_indices = @transform_11, window_bounds = array<i64: 32, 32>}, {pipeline_mode = #tpu.pipeline_mode<synchronous>, transform_indices = @transform_12, window_bounds = array<i64: 1, 32>}, {pipeline_mode = #tpu.pipeline_mode<synchronous>, transform_indices = @transform_13, window_bounds = array<i64: 32, 4>}, {pipeline_mode = #tpu.pipeline_mode<synchronous>, transform_indices = @transform_14, window_bounds = array<i64: 4, 32>}, {pipeline_mode = #tpu.pipeline_mode<synchronous>, transform_indices = @transform_15, window_bounds = array<i64: 1, 32>}, {transform_indices = @transform_16, window_bounds = array<i64: 8, 4>}, {transform_indices = @transform_17, window_bounds = array<i64: 8, 4>}, {transform_indices = @transform_18, window_bounds = array<i64: 8, 32>}, {transform_indices = @transform_19, window_bounds = array<i64: 8, 32>}, {transform_indices = @transform_20, window_bounds = array<i64: 8, 4>}, {transform_indices = @transform_21, window_bounds = array<i64: 8, 32>}]} {
    %c0 = arith.constant 0 : index
    %c0_0 = arith.constant 0 : index
    %0 = vector.load %arg1[%c0, %c0_0] : memref<8x32xf32, #tpu.memory_space<vmem>>, vector<8x32xf32>
    %c0_1 = arith.constant 0 : index
    %c0_2 = arith.constant 0 : index
    %1 = vector.load %arg2[%c0_1, %c0_2] : memref<32x32xf32, #tpu.memory_space<vmem>>, vector<32x32xf32>
    %cst = arith.constant dense<0.000000e+00> : vector<8x32xf32>
    %2 = tpu.matmul %0, %1, %cst {dimension_numbers = #tpu.dot_dimension_numbers<[1], [0], [0], [1], [0, 0, 1, 1], [], []>} : vector<8x32xf32>, vector<32x32xf32>, vector<8x32xf32> -> vector<8x32xf32>
    %c0_3 = arith.constant 0 : index
    %c0_4 = arith.constant 0 : index
    %3 = vector.load %arg3[%c0_3, %c0_4] : memref<1x32xf32, #tpu.memory_space<vmem>>, vector<1x32xf32>
    %4 = vector.broadcast %3 : vector<1x32xf32> to vector<8x32xf32>
    %5 = arith.addf %2, %4 : vector<8x32xf32>
    %cst_5 = arith.constant 0.000000e+00 : f32
    %6 = vector.broadcast %cst_5 : f32 to vector<8x32xf32>
    %7 = arith.maximumf %5, %6 : vector<8x32xf32>
    %c0_6 = arith.constant 0 : index
    %c0_7 = arith.constant 0 : index
    %8 = vector.load %arg4[%c0_6, %c0_7] : memref<32x4xf32, #tpu.memory_space<vmem>>, vector<32x4xf32>
    %cst_8 = arith.constant dense<0.000000e+00> : vector<8x4xf32>
    %9 = tpu.matmul %7, %8, %cst_8 {dimension_numbers = #tpu.dot_dimension_numbers<[1], [0], [0], [1], [0, 0, 1, 1], [], []>} : vector<8x32xf32>, vector<32x4xf32>, vector<8x4xf32> -> vector<8x4xf32>
    %c0_9 = arith.constant 0 : index
    %c0_10 = arith.constant 0 : index
    %10 = vector.load %arg5[%c0_9, %c0_10] : memref<1x4xf32, #tpu.memory_space<vmem>>, vector<1x4xf32>
    %11 = vector.broadcast %10 : vector<1x4xf32> to vector<8x4xf32>
    %12 = arith.addf %9, %11 : vector<8x4xf32>
    %cst_11 = arith.constant 0.000000e+00 : f32
    %13 = vector.broadcast %cst_11 : f32 to vector<8x4xf32>
    %14 = arith.subf %13, %12 : vector<8x4xf32>
    %15 = math.exp %14 : vector<8x4xf32>
    %cst_12 = arith.constant 1.000000e+00 : f32
    %16 = vector.broadcast %cst_12 : f32 to vector<8x4xf32>
    %17 = arith.addf %16, %15 : vector<8x4xf32>
    %18 = tpu.reciprocal %17 {approx = true} : vector<8x4xf32> -> vector<8x4xf32>
    %c0_13 = arith.constant 0 : index
    %c0_14 = arith.constant 0 : index
    %19 = vector.load %arg21[%c0_13, %c0_14] : memref<8x4xf32, #tpu.memory_space<vmem>>, vector<8x4xf32>
    tpu.vector_store %arg21[%c0_13, %c0_14], %18 {strides = array<i32>} : memref<8x4xf32, #tpu.memory_space<vmem>>, vector<8x4xf32>,
    %c0_15 = arith.constant 0 : index
    %c0_16 = arith.constant 0 : index
    %20 = vector.load %arg17[%c0_15, %c0_16] : memref<8x4xf32, #tpu.memory_space<vmem>>, vector<8x4xf32>
    %21 = math.log %20 : vector<8x4xf32>
    %cst_17 = arith.constant 0.000000e+00 : f32
    %22 = vector.broadcast %cst_17 : f32 to vector<8x4xf32>
    %23 = arith.subf %22, %21 : vector<8x4xf32>
    %c0_18 = arith.constant 0 : index
    %c0_19 = arith.constant 0 : index
    %24 = vector.load %arg18[%c0_18, %c0_19] : memref<8x4xf32, #tpu.memory_space<vmem>>, vector<8x4xf32>
    %25 = math.log %24 : vector<8x4xf32>
    %cst_20 = arith.constant 0.000000e+00 : f32
    %26 = vector.broadcast %cst_20 : f32 to vector<8x4xf32>
    %27 = arith.subf %26, %25 : vector<8x4xf32>
    %28 = arith.mulf %18, %27 : vector<8x4xf32>
    %cst_21 = arith.constant 1.000000e+00 : f32
    %29 = vector.broadcast %cst_21 : f32 to vector<8x4xf32>
    %30 = arith.subf %29, %18 : vector<8x4xf32>
    %31 = arith.mulf %30, %23 : vector<8x4xf32>
    %32 = arith.addf %28, %31 : vector<8x4xf32>
    %33 = tpu.reciprocal %32 {approx = true} : vector<8x4xf32> -> vector<8x4xf32>
    %34 = arith.mulf %28, %33 : vector<8x4xf32>
    %c0_22 = arith.constant 0 : index
    %c0_23 = arith.constant 0 : index
    %35 = vector.load %arg6[%c0_22, %c0_23] : memref<32x32xf32, #tpu.memory_space<vmem>>, vector<32x32xf32>
    %cst_24 = arith.constant dense<0.000000e+00> : vector<8x32xf32>
    %36 = tpu.matmul %0, %35, %cst_24 {dimension_numbers = #tpu.dot_dimension_numbers<[1], [0], [0], [1], [0, 0, 1, 1], [], []>} : vector<8x32xf32>, vector<32x32xf32>, vector<8x32xf32> -> vector<8x32xf32>
    %c0_25 = arith.constant 0 : index
    %c0_26 = arith.constant 0 : index
    %37 = vector.load %arg7[%c0_25, %c0_26] : memref<1x32xf32, #tpu.memory_space<vmem>>, vector<1x32xf32>
    %38 = vector.broadcast %37 : vector<1x32xf32> to vector<8x32xf32>
    %39 = arith.addf %36, %38 : vector<8x32xf32>
    %cst_27 = arith.constant 0.000000e+00 : f32
    %40 = vector.broadcast %cst_27 : f32 to vector<8x32xf32>
    %41 = arith.maximumf %39, %40 : vector<8x32xf32>
    %c0_28 = arith.constant 0 : index
    %c0_29 = arith.constant 0 : index
    %42 = vector.load %arg8[%c0_28, %c0_29] : memref<32x32xf32, #tpu.memory_space<vmem>>, vector<32x32xf32>
    %cst_30 = arith.constant dense<0.000000e+00> : vector<8x32xf32>
    %43 = tpu.matmul %41, %42, %cst_30 {dimension_numbers = #tpu.dot_dimension_numbers<[1], [0], [0], [1], [0, 0, 1, 1], [], []>} : vector<8x32xf32>, vector<32x32xf32>, vector<8x32xf32> -> vector<8x32xf32>
    %c0_31 = arith.constant 0 : index
    %c0_32 = arith.constant 0 : index
    %44 = vector.load %arg9[%c0_31, %c0_32] : memref<1x32xf32, #tpu.memory_space<vmem>>, vector<1x32xf32>
    %45 = vector.broadcast %44 : vector<1x32xf32> to vector<8x32xf32>
    %46 = arith.addf %43, %45 : vector<8x32xf32>
    %cst_33 = arith.constant 0.000000e+00 : f32
    %47 = vector.broadcast %cst_33 : f32 to vector<8x32xf32>
    %48 = arith.maximumf %46, %47 : vector<8x32xf32>
    %c0_34 = arith.constant 0 : index
    %c0_35 = arith.constant 0 : index
    %49 = vector.load %arg10[%c0_34, %c0_35] : memref<32x32xf32, #tpu.memory_space<vmem>>, vector<32x32xf32>
    %cst_36 = arith.constant dense<0.000000e+00> : vector<8x32xf32>
    %50 = tpu.matmul %48, %49, %cst_36 {dimension_numbers = #tpu.dot_dimension_numbers<[1], [0], [0], [1], [0, 0, 1, 1], [], []>} : vector<8x32xf32>, vector<32x32xf32>, vector<8x32xf32> -> vector<8x32xf32>
    %c0_37 = arith.constant 0 : index
    %c0_38 = arith.constant 0 : index
    %51 = vector.load %arg11[%c0_37, %c0_38] : memref<1x32xf32, #tpu.memory_space<vmem>>, vector<1x32xf32>
    %52 = vector.broadcast %51 : vector<1x32xf32> to vector<8x32xf32>
    %53 = arith.addf %50, %52 : vector<8x32xf32>
    %cst_39 = arith.constant 0.000000e+00 : f32
    %54 = vector.broadcast %cst_39 : f32 to vector<8x32xf32>
    %55 = arith.maximumf %53, %54 : vector<8x32xf32>
    %c0_40 = arith.constant 0 : index
    %c0_41 = arith.constant 0 : index
    %56 = vector.load %arg12[%c0_40, %c0_41] : memref<32x32xf32, #tpu.memory_space<vmem>>, vector<32x32xf32>
    %cst_42 = arith.constant dense<0.000000e+00> : vector<8x32xf32>
    %57 = tpu.matmul %55, %56, %cst_42 {dimension_numbers = #tpu.dot_dimension_numbers<[1], [0], [0], [1], [0, 0, 1, 1], [], []>} : vector<8x32xf32>, vector<32x32xf32>, vector<8x32xf32> -> vector<8x32xf32>
    %c0_43 = arith.constant 0 : index
    %c0_44 = arith.constant 0 : index
    %58 = vector.load %arg13[%c0_43, %c0_44] : memref<1x32xf32, #tpu.memory_space<vmem>>, vector<1x32xf32>
    %59 = vector.broadcast %58 : vector<1x32xf32> to vector<8x32xf32>
    %60 = arith.addf %57, %59 : vector<8x32xf32>
    %c0_45 = arith.constant 0 : index
    %c0_46 = arith.constant 0 : index
    %61 = vector.load %arg22[%c0_45, %c0_46] : memref<8x32xf32, #tpu.memory_space<vmem>>, vector<8x32xf32>
    tpu.vector_store %arg22[%c0_45, %c0_46], %60 {strides = array<i32>} : memref<8x32xf32, #tpu.memory_space<vmem>>, vector<8x32xf32>,
    %c0_47 = arith.constant 0 : index
    %c0_48 = arith.constant 0 : index
    %62 = vector.load %arg14[%c0_47, %c0_48] : memref<32x4xf32, #tpu.memory_space<vmem>>, vector<32x4xf32>
    %c0_49 = arith.constant 0 : index
    %c0_50 = arith.constant 0 : index
    %63 = vector.load %arg15[%c0_49, %c0_50] : memref<4x32xf32, #tpu.memory_space<vmem>>, vector<4x32xf32>
    %c0_51 = arith.constant 0 : index
    %c0_52 = arith.constant 0 : index
    %64 = vector.load %arg19[%c0_51, %c0_52] : memref<8x32xf32, #tpu.memory_space<vmem>>, vector<8x32xf32>
    %65 = arith.addf %60, %64 : vector<8x32xf32>
    %cst_53 = arith.constant 1.42857146 : f32
    %66 = vector.broadcast %cst_53 : f32 to vector<8x32xf32>
    %67 = arith.mulf %65, %66 : vector<8x32xf32>
    %cst_54 = arith.constant dense<0xFF800000> : vector<8xf32>
    %68 = vector.multi_reduction <maximumf>, %67, %cst_54 [1] : vector<8x32xf32> to vector<8xf32>
    %69 = vector.shape_cast %68 : vector<8xf32> to vector<8x1xf32>
    %70 = vector.broadcast %69 : vector<8x1xf32> to vector<8x32xf32>
    %71 = arith.subf %67, %70 : vector<8x32xf32>
    %72 = math.exp %71 : vector<8x32xf32>
    %cst_55 = arith.constant dense<0.000000e+00> : vector<8x4xf32>
    %73 = tpu.matmul %72, %62, %cst_55 {dimension_numbers = #tpu.dot_dimension_numbers<[1], [0], [0], [1], [0, 0, 1, 1], [], []>} : vector<8x32xf32>, vector<32x4xf32>, vector<8x4xf32> -> vector<8x4xf32>
    %cst_56 = arith.constant dense<0.000000e+00> : vector<8x32xf32>
    %74 = tpu.matmul %73, %63, %cst_56 {dimension_numbers = #tpu.dot_dimension_numbers<[1], [0], [0], [1], [0, 0, 1, 1], [], []>} : vector<8x4xf32>, vector<4x32xf32>, vector<8x32xf32> -> vector<8x32xf32>
    %c0_57 = arith.constant 0 : index
    %c0_58 = arith.constant 0 : index
    %75 = vector.load %arg16[%c0_57, %c0_58] : memref<1x32xf32, #tpu.memory_space<vmem>>, vector<1x32xf32>
    %76 = vector.broadcast %75 : vector<1x32xf32> to vector<8x32xf32>
    %77 = arith.addf %74, %76 : vector<8x32xf32>
    %78 = tpu.reciprocal %77 {approx = true} : vector<8x32xf32> -> vector<8x32xf32>
    %79 = arith.mulf %72, %78 : vector<8x32xf32>
    %cst_59 = arith.constant dense<0.000000e+00> : vector<8x32xf32>
    %80 = tpu.matmul %34, %63, %cst_59 {dimension_numbers = #tpu.dot_dimension_numbers<[1], [0], [0], [1], [0, 0, 1, 1], [], []>} : vector<8x4xf32>, vector<4x32xf32>, vector<8x32xf32> -> vector<8x32xf32>
    %81 = arith.mulf %80, %79 : vector<8x32xf32>
    %cst_60 = arith.constant 1.000000e+00 : f32
    %82 = vector.broadcast %cst_60 : f32 to vector<8x32xf32>
    %83 = arith.subf %82, %80 : vector<8x32xf32>
    %84 = arith.mulf %83, %0 : vector<8x32xf32>
    %85 = arith.addf %81, %84 : vector<8x32xf32>
    %c0_61 = arith.constant 0 : index
    %c0_62 = arith.constant 0 : index
    %86 = vector.load %arg20[%c0_61, %c0_62] : memref<8x32xf32, #tpu.memory_space<vmem>>, vector<8x32xf32>
    tpu.vector_store %arg20[%c0_61, %c0_62], %85 {strides = array<i32>} : memref<8x32xf32, #tpu.memory_space<vmem>>, vector<8x32xf32>,
    return
  }
  func.func @transform_0(%arg0: i32) -> (i32, i32) {
    %c0_i32 = arith.constant 0 : i32
    %c0_i32_0 = arith.constant 0 : i32
    return %arg0, %c0_i32 : i32, i32
  }
  func.func @transform_1(%arg0: i32) -> (i32, i32) {
    %c0_i32 = arith.constant 0 : i32
    %c0_i32_0 = arith.constant 0 : i32
    %c0_i32_1 = arith.constant 0 : i32
    return %c0_i32, %c0_i32_0 : i32, i32
  }
  func.func @transform_2(%arg0: i32) -> (i32, i32) {
    %c0_i32 = arith.constant 0 : i32
    %c0_i32_0 = arith.constant 0 : i32
    %c0_i32_1 = arith.constant 0 : i32
    return %c0_i32, %c0_i32_0 : i32, i32
  }
  func.func @transform_3(%arg0: i32) -> (i32, i32) {
    %c0_i32 = arith.constant 0 : i32
    %c0_i32_0 = arith.constant 0 : i32
    %c0_i32_1 = arith.constant 0 : i32
    return %c0_i32, %c0_i32_0 : i32, i32
  }
  func.func @transform_4(%arg0: i32) -> (i32, i32) {
    %c0_i32 = arith.constant 0 : i32
    %c0_i32_0 = arith.constant 0 : i32
    %c0_i32_1 = arith.constant 0 : i32
    return %c0_i32, %c0_i32_0 : i32, i32
  }
  func.func @transform_5(%arg0: i32) -> (i32, i32) {
    %c0_i32 = arith.constant 0 : i32
    %c0_i32_0 = arith.constant 0 : i32
    %c0_i32_1 = arith.constant 0 : i32
    return %c0_i32, %c0_i32_0 : i32, i32
  }
  func.func @transform_6(%arg0: i32) -> (i32, i32) {
    %c0_i32 = arith.constant 0 : i32
    %c0_i32_0 = arith.constant 0 : i32
    %c0_i32_1 = arith.constant 0 : i32
    return %c0_i32, %c0_i32_0 : i32, i32
  }
  func.func @transform_7(%arg0: i32) -> (i32, i32) {
    %c0_i32 = arith.constant 0 : i32
    %c0_i32_0 = arith.constant 0 : i32
    %c0_i32_1 = arith.constant 0 : i32
    return %c0_i32, %c0_i32_0 : i32, i32
  }
  func.func @transform_8(%arg0: i32) -> (i32, i32) {
    %c0_i32 = arith.constant 0 : i32
    %c0_i32_0 = arith.constant 0 : i32
    %c0_i32_1 = arith.constant 0 : i32
    return %c0_i32, %c0_i32_0 : i32, i32
  }
  func.func @transform_9(%arg0: i32) -> (i32, i32) {
    %c0_i32 = arith.constant 0 : i32
    %c0_i32_0 = arith.constant 0 : i32
    %c0_i32_1 = arith.constant 0 : i32
    return %c0_i32, %c0_i32_0 : i32, i32
  }
  func.func @transform_10(%arg0: i32) -> (i32, i32) {
    %c0_i32 = arith.constant 0 : i32
    %c0_i32_0 = arith.constant 0 : i32
    %c0_i32_1 = arith.constant 0 : i32
    return %c0_i32, %c0_i32_0 : i32, i32
  }
  func.func @transform_11(%arg0: i32) -> (i32, i32) {
    %c0_i32 = arith.constant 0 : i32
    %c0_i32_0 = arith.constant 0 : i32
    %c0_i32_1 = arith.constant 0 : i32
    return %c0_i32, %c0_i32_0 : i32, i32
  }
  func.func @transform_12(%arg0: i32) -> (i32, i32) {
    %c0_i32 = arith.constant 0 : i32
    %c0_i32_0 = arith.constant 0 : i32
    %c0_i32_1 = arith.constant 0 : i32
    return %c0_i32, %c0_i32_0 : i32, i32
  }
  func.func @transform_13(%arg0: i32) -> (i32, i32) {
    %c0_i32 = arith.constant 0 : i32
    %c0_i32_0 = arith.constant 0 : i32
    %c0_i32_1 = arith.constant 0 : i32
    return %c0_i32, %c0_i32_0 : i32, i32
  }
  func.func @transform_14(%arg0: i32) -> (i32, i32) {
    %c0_i32 = arith.constant 0 : i32
    %c0_i32_0 = arith.constant 0 : i32
    %c0_i32_1 = arith.constant 0 : i32
    return %c0_i32, %c0_i32_0 : i32, i32
  }
  func.func @transform_15(%arg0: i32) -> (i32, i32) {
    %c0_i32 = arith.constant 0 : i32
    %c0_i32_0 = arith.constant 0 : i32
    %c0_i32_1 = arith.constant 0 : i32
    return %c0_i32, %c0_i32_0 : i32, i32
  }
  func.func @transform_16(%arg0: i32) -> (i32, i32) {
    %c0_i32 = arith.constant 0 : i32
    %c0_i32_0 = arith.constant 0 : i32
    return %arg0, %c0_i32 : i32, i32
  }
  func.func @transform_17(%arg0: i32) -> (i32, i32) {
    %c0_i32 = arith.constant 0 : i32
    %c0_i32_0 = arith.constant 0 : i32
    return %arg0, %c0_i32 : i32, i32
  }
  func.func @transform_18(%arg0: i32) -> (i32, i32) {
    %c0_i32 = arith.constant 0 : i32
    %c0_i32_0 = arith.constant 0 : i32
    return %arg0, %c0_i32 : i32, i32
  }
  func.func @transform_19(%arg0: i32) -> (i32, i32) {
    %c0_i32 = arith.constant 0 : i32
    %c0_i32_0 = arith.constant 0 : i32
    return %arg0, %c0_i32 : i32, i32
  }
  func.func @transform_20(%arg0: i32) -> (i32, i32) {
    %c0_i32 = arith.constant 0 : i32
    %c0_i32_0 = arith.constant 0 : i32
    return %arg0, %c0_i32 : i32, i32
  }
  func.func @transform_21(%arg0: i32) -> (i32, i32) {
    %c0_i32 = arith.constant 0 : i32
    %c0_i32_0 = arith.constant 0 : i32
    return %arg0, %c0_i32 : i32, i32
  }
}

</mosaic_0001>

<llo_original>
// kernel: tpu_custom_call.1
$region0: #{tpu_custom_call.1}
  #allocation0 [shape = 'u32[]', space=smem, size = 0x4, offset = 0x4, fixed_abs, tag = 'smem constant byte address 0x4 - core index']
  #allocation1 [shape = 'u32[72,128]{1,0:T(1,128)}', space=vmem, size = 0x9000, scoped, tag = 'internal scratch']
  %s0 = inlined_call_operand.hbm [shape: f32[16,32], index: 0, kind: input, shape index: {}]
  %s1 = inlined_call_operand.vmem [shape: f32[32,32], index: 1, kind: input, shape index: {}]
  %s2 = inlined_call_operand.vmem [shape: f32[1,32], index: 2, kind: input, shape index: {}]
  %s3 = inlined_call_operand.vmem [shape: f32[32,4], index: 3, kind: input, shape index: {}]
  %s4 = inlined_call_operand.vmem [shape: f32[1,4], index: 4, kind: input, shape index: {}]
  %s5 = inlined_call_operand.vmem [shape: f32[32,32], index: 5, kind: input, shape index: {}]
  %s6 = inlined_call_operand.vmem [shape: f32[1,32], index: 6, kind: input, shape index: {}]
  %s7 = inlined_call_operand.vmem [shape: f32[32,32], index: 7, kind: input, shape index: {}]
  %s8 = inlined_call_operand.hbm [shape: f32[1,32], index: 8, kind: input, shape index: {}]
  %s9 = inlined_call_operand.hbm [shape: f32[32,32], index: 9, kind: input, shape index: {}]
  %s10 = inlined_call_operand.vmem [shape: f32[1,32], index: 10, kind: input, shape index: {}]
  %s11 = inlined_call_operand.hbm [shape: f32[32,32], index: 11, kind: input, shape index: {}]
  %s12 = inlined_call_operand.vmem [shape: f32[1,32], index: 12, kind: input, shape index: {}]
  %s13 = inlined_call_operand.vmem [shape: f32[32,4], index: 13, kind: input, shape index: {}]
  %s14 = inlined_call_operand.vmem [shape: f32[4,32], index: 14, kind: input, shape index: {}]
  %s15 = inlined_call_operand.vmem [shape: f32[1,32], index: 15, kind: input, shape index: {}]
  %s16 = inlined_call_operand.vmem [shape: f32[16,4], index: 16, kind: input, shape index: {}]
  %s17 = inlined_call_operand.vmem [shape: f32[16,4], index: 17, kind: input, shape index: {}]
  %s18 = inlined_call_operand.hbm [shape: f32[16,32], index: 18, kind: input, shape index: {}]
  %s19 = inlined_call_operand.hbm [shape: f32[16,32], index: 19, kind: output, shape index: {0}]
  %s20 = inlined_call_operand.vmem [shape: f32[16,4], index: 20, kind: output, shape index: {1}]
  %s21 = inlined_call_operand.hbm [shape: f32[16,32], index: 21, kind: output, shape index: {2}]
  %22 = xla_tuple %s19, %s20, %s21
  %s23 = sld [smem:[#allocation0]]
  $region145: #{tpu_custom_call.1} parent=0
    _
  %s25 = ssub.s32 1, %s23
  %s26 = scalar_select 0, %s25, %s23
  $region1: #{tpu_custom_call.1} parent=0
    #allocation2 [shape = 'u8[8192]{0}', space=vmem, size = 0x2000, scoped, tag = 'input window, operand 0']
    #allocation3 [shape = 's32[2]{0}', space=sflag, size = 0x8, scoped, tag = 'scoped memory for tpu_custom_call.1']
    #allocation4 [shape = 's32[2]{0}', space=sflag, size = 0x8, scoped, tag = 'scoped memory for tpu_custom_call.1']
    #allocation5 [shape = 'u8[512]{0}', space=vmem, size = 0x400, scoped, tag = 'input window, operand 8, single buffered']
    #allocation6 [shape = 's32[1]{0}', space=sflag, size = 0x4, scoped, tag = 'scoped memory for tpu_custom_call.1']
    #allocation7 [shape = 'u8[16384]{0}', space=vmem, size = 0x4000, scoped, tag = 'input window, operand 9, single buffered']
    #allocation8 [shape = 'u8[16384]{0}', space=vmem, size = 0x4000, scoped, tag = 'input window, operand 11, single buffered']
    #allocation9 [shape = 's32[1]{0}', space=sflag, size = 0x4, scoped, tag = 'scoped memory for tpu_custom_call.1']
    #allocation10 [shape = 'u8[8192]{0}', space=vmem, size = 0x2000, scoped, tag = 'input window, operand 18']
    #allocation11 [shape = 'u8[8192]{0}', space=vmem, size = 0x2000, scoped, tag = 'output window, operand 0']
    #allocation12 [shape = 'u8[8192]{0}', space=vmem, size = 0x2000, scoped, tag = 'output window, operand 2']
    #allocation13 [shape = 's32[2]{0}', space=sflag, size = 0x8, scoped, tag = 'scoped memory for tpu_custom_call.1']
    %27 = vsyncpa [#allocation3], 0
    %s28 = scalar_lea.sflag [#allocation3], 1
    %29 = vsyncpa %s28, 0
    %30 = vsyncpa [#allocation6], 0
    %31 = vsyncpa [#allocation9], 0
    %32 = vsyncpa [#allocation4], 0
    %s33 = scalar_lea.sflag [#allocation4], 1
    %34 = vsyncpa %s33, 0
    %35 = vsyncpa [#allocation13], 0
    %s36 = scalar_lea.sflag [#allocation13], 1
    %37 = vsyncpa %s36, 0
    loop: start=0, step=1, limit=4
    $region2: #{tpu_custom_call.1} parent=1 // loop_pre_header
      _
    $region3: #{tpu_custom_call.1} parent=1 // loop_header
      %s39 = sphi 0, %s43
      %p40 = scmp.ge.s32.totalorder %s39, 4
      %s49 = sphi 0, %s51
      %s52 = sphi 0, %s49
      %s53 = sphi 0, %s52
      %s69 = sphi 0, %s53
      %s73 = sphi 0, %s73
      %s75 = sphi 0, %s73
      %s76 = sphi 0, %s75
      %s90 = sphi 0, %s76
      %s94 = sphi 0, %s94
      %s96 = sphi 0, %s94
      %s97 = sphi 0, %s96
      %s111 = sphi 0, %s97
      %s115 = sphi 0, %s115
      %s117 = sphi 0, %s115
      %s118 = sphi 0, %s117
      %s132 = sphi 0, %s118
      %s136 = sphi 0, %s136
      %s138 = sphi 0, %s136
      %s139 = sphi 0, %s138
      %s153 = sphi 0, %s139
      %s157 = sphi 0, %s157
      %s159 = sphi 0, %s157
      %s160 = sphi 0, %s159
      %s174 = sphi 0, %s160
      %s178 = sphi 0, %s178
      %s180 = sphi 0, %s178
      %s181 = sphi 0, %s180
      %s195 = sphi 0, %s181
      %s199 = sphi 0, %s199
      %s201 = sphi 0, %s199
      %s202 = sphi 0, %s201
      %s216 = sphi 0, %s202
      %s220 = sphi 0, %s220
      %s222 = sphi 0, %s220
      %s223 = sphi 0, %s222
      %s237 = sphi 0, %s223
      %s241 = sphi 0, %s241
      %s243 = sphi 0, %s241
      %s244 = sphi 0, %s243
      %s258 = sphi 0, %s244
      %s262 = sphi 0, %s262
      %s264 = sphi 0, %s262
      %s265 = sphi 0, %s264
      %s279 = sphi 0, %s265
      %s283 = sphi 0, %s283
      %s285 = sphi 0, %s283
      %s286 = sphi 0, %s285
      %s300 = sphi 0, %s286
      %s304 = sphi 0, %s304
      %s306 = sphi 0, %s304
      %s307 = sphi 0, %s306
      %s321 = sphi 0, %s307
      %s325 = sphi 0, %s325
      %s327 = sphi 0, %s325
      %s328 = sphi 0, %s327
      %s342 = sphi 0, %s328
      %s346 = sphi 0, %s346
      %s348 = sphi 0, %s346
      %s349 = sphi 0, %s348
      %s363 = sphi 0, %s349
      %s367 = sphi 0, %s367
      %s369 = sphi 0, %s367
      %s370 = sphi 0, %s369
      %s384 = sphi 0, %s370
      %s390 = sphi 0, %s392
      %s393 = sphi 0, %s390
      %s394 = sphi 0, %s393
      %s410 = sphi 0, %s394
      %s416 = sphi 0, %s418
      %s419 = sphi 0, %s416
      %s420 = sphi 0, %s419
      %s436 = sphi 0, %s420
      %s442 = sphi 0, %s444
      %s445 = sphi 0, %s442
      %s446 = sphi 0, %s445
      %s462 = sphi 0, %s446
      %s468 = sphi 0, %s470
      %s471 = sphi 0, %s468
      %s472 = sphi 0, %s471
      %s488 = sphi 0, %s472
      %s494 = sphi 0, %s496
      %s497 = sphi 0, %s494
      %s498 = sphi 0, %s497
      %s514 = sphi 0, %s498
      %s520 = sphi 0, %s522
      %s523 = sphi 0, %s520
      %s524 = sphi 0, %s523
      %s540 = sphi 0, %s524
    $region4: #{tpu_custom_call.1} parent=1 // loop_header_branch
      %42 = sbr.rel (%p40) target = $region8
    $region5: #{tpu_custom_call.1} parent=1 // loop_body
      %s44 = ssub.s32 %s39, 1
      %s45 = ssub.s32 %s39, 2
      %s46 = sadd.s32 %s39, 1
      %s47 = ssub.s32 %s39, %s46
      %p48 = scmp.eq.s32.totalorder %s47, 0
      %s50 = sadd.s32 %s49, 1
      %s51 = scalar_select %p48, %s49, %s50
      %p54 = pneg %p48
      %p55 = scmp.eq.s32.totalorder %s39, 1
      %p56 = por %p54, %p55
      %p57 = scmp.ne.s32.totalorder %s49, %s52
      %p58 = scmp.eq.s32.totalorder %s39, 0
      %p59 = por %p57, %p58
      %p60 = scmp.ne.s32.totalorder %s49, %s52
      %p61 = scmp.eq.s32.totalorder %s44, 1
      %p62 = por %p60, %p61
      %p63 = scmp.ne.s32.totalorder %s52, %s53
      %p64 = scmp.eq.s32.totalorder %s44, 0
      %p65 = por %p63, %p64
      %p66 = scmp.ne.s32.totalorder %s52, %s53
      %p67 = scmp.eq.s32.totalorder %s45, 1
      %p68 = por %p66, %p67
      %p70 = scmp.ne.s32.totalorder %s53, %s69
      %p71 = scmp.eq.s32.totalorder %s45, 0
      %p72 = por %p70, %p71
      %s74 = sadd.s32 %s73, 1
      %p77 = scmp.eq.s32.totalorder %s39, 1
      %p78 = scmp.ne.s32.totalorder %s73, %s75
      %p79 = scmp.eq.s32.totalorder %s39, 0
      %p80 = por %p78, %p79
      %p81 = scmp.ne.s32.totalorder %s73, %s75
      %p82 = scmp.eq.s32.totalorder %s44, 1
      %p83 = por %p81, %p82
      %p84 = scmp.ne.s32.totalorder %s75, %s76
      %p85 = scmp.eq.s32.totalorder %s44, 0
      %p86 = por %p84, %p85
      %p87 = scmp.ne.s32.totalorder %s75, %s76
      %p88 = scmp.eq.s32.totalorder %s45, 1
      %p89 = por %p87, %p88
      %p91 = scmp.ne.s32.totalorder %s76, %s90
      %p92 = scmp.eq.s32.totalorder %s45, 0
      %p93 = por %p91, %p92
      %s95 = sadd.s32 %s94, 1
      %p98 = scmp.eq.s32.totalorder %s39, 1
      %p99 = scmp.ne.s32.totalorder %s94, %s96
      %p100 = scmp.eq.s32.totalorder %s39, 0
      %p101 = por %p99, %p100
      %p102 = scmp.ne.s32.totalorder %s94, %s96
      %p103 = scmp.eq.s32.totalorder %s44, 1
      %p104 = por %p102, %p103
      %p105 = scmp.ne.s32.totalorder %s96, %s97
      %p106 = scmp.eq.s32.totalorder %s44, 0
      %p107 = por %p105, %p106
      %p108 = scmp.ne.s32.totalorder %s96, %s97
      %p109 = scmp.eq.s32.totalorder %s45, 1
      %p110 = por %p108, %p109
      %p112 = scmp.ne.s32.totalorder %s97, %s111
      %p113 = scmp.eq.s32.totalorder %s45, 0
      %p114 = por %p112, %p113
      %s116 = sadd.s32 %s115, 1
      %p119 = scmp.eq.s32.totalorder %s39, 1
      %p120 = scmp.ne.s32.totalorder %s115, %s117
      %p121 = scmp.eq.s32.totalorder %s39, 0
      %p122 = por %p120, %p121
      %p123 = scmp.ne.s32.totalorder %s115, %s117
      %p124 = scmp.eq.s32.totalorder %s44, 1
      %p125 = por %p123, %p124
      %p126 = scmp.ne.s32.totalorder %s117, %s118
      %p127 = scmp.eq.s32.totalorder %s44, 0
      %p128 = por %p126, %p127
      %p129 = scmp.ne.s32.totalorder %s117, %s118
      %p130 = scmp.eq.s32.totalorder %s45, 1
      %p131 = por %p129, %p130
      %p133 = scmp.ne.s32.totalorder %s118, %s132
      %p134 = scmp.eq.s32.totalorder %s45, 0
      %p135 = por %p133, %p134
      %s137 = sadd.s32 %s136, 1
      %p140 = scmp.eq.s32.totalorder %s39, 1
      %p141 = scmp.ne.s32.totalorder %s136, %s138
      %p142 = scmp.eq.s32.totalorder %s39, 0
      %p143 = por %p141, %p142
      %p144 = scmp.ne.s32.totalorder %s136, %s138
      %p145 = scmp.eq.s32.totalorder %s44, 1
      %p146 = por %p144, %p145
      %p147 = scmp.ne.s32.totalorder %s138, %s139
      %p148 = scmp.eq.s32.totalorder %s44, 0
      %p149 = por %p147, %p148
      %p150 = scmp.ne.s32.totalorder %s138, %s139
      %p151 = scmp.eq.s32.totalorder %s45, 1
      %p152 = por %p150, %p151
      %p154 = scmp.ne.s32.totalorder %s139, %s153
      %p155 = scmp.eq.s32.totalorder %s45, 0
      %p156 = por %p154, %p155
      %s158 = sadd.s32 %s157, 1
      %p161 = scmp.eq.s32.totalorder %s39, 1
      %p162 = scmp.ne.s32.totalorder %s157, %s159
      %p163 = scmp.eq.s32.totalorder %s39, 0
      %p164 = por %p162, %p163
      %p165 = scmp.ne.s32.totalorder %s157, %s159
      %p166 = scmp.eq.s32.totalorder %s44, 1
      %p167 = por %p165, %p166
      %p168 = scmp.ne.s32.totalorder %s159, %s160
      %p169 = scmp.eq.s32.totalorder %s44, 0
      %p170 = por %p168, %p169
      %p171 = scmp.ne.s32.totalorder %s159, %s160
      %p172 = scmp.eq.s32.totalorder %s45, 1
      %p173 = por %p171, %p172
      %p175 = scmp.ne.s32.totalorder %s160, %s174
      %p176 = scmp.eq.s32.totalorder %s45, 0
      %p177 = por %p175, %p176
      %s179 = sadd.s32 %s178, 1
      %p182 = scmp.eq.s32.totalorder %s39, 1
      %p183 = scmp.ne.s32.totalorder %s178, %s180
      %p184 = scmp.eq.s32.totalorder %s39, 0
      %p185 = por %p183, %p184
      %p186 = scmp.ne.s32.totalorder %s178, %s180
      %p187 = scmp.eq.s32.totalorder %s44, 1
      %p188 = por %p186, %p187
      %p189 = scmp.ne.s32.totalorder %s180, %s181
      %p190 = scmp.eq.s32.totalorder %s44, 0
      %p191 = por %p189, %p190
      %p192 = scmp.ne.s32.totalorder %s180, %s181
      %p193 = scmp.eq.s32.totalorder %s45, 1
      %p194 = por %p192, %p193
      %p196 = scmp.ne.s32.totalorder %s181, %s195
      %p197 = scmp.eq.s32.totalorder %s45, 0
      %p198 = por %p196, %p197
      %s200 = sadd.s32 %s199, 1
      %p203 = scmp.eq.s32.totalorder %s39, 1
      %p204 = scmp.ne.s32.totalorder %s199, %s201
      %p205 = scmp.eq.s32.totalorder %s39, 0
      %p206 = por %p204, %p205
      %p207 = scmp.ne.s32.totalorder %s199, %s201
      %p208 = scmp.eq.s32.totalorder %s44, 1
      %p209 = por %p207, %p208
      %p210 = scmp.ne.s32.totalorder %s201, %s202
      %p211 = scmp.eq.s32.totalorder %s44, 0
      %p212 = por %p210, %p211
      %p213 = scmp.ne.s32.totalorder %s201, %s202
      %p214 = scmp.eq.s32.totalorder %s45, 1
      %p215 = por %p213, %p214
      %p217 = scmp.ne.s32.totalorder %s202, %s216
      %p218 = scmp.eq.s32.totalorder %s45, 0
      %p219 = por %p217, %p218
      %s221 = sadd.s32 %s220, 1
      %p224 = scmp.eq.s32.totalorder %s39, 1
      %p225 = scmp.ne.s32.totalorder %s220, %s222
      %p226 = scmp.eq.s32.totalorder %s39, 0
      %p227 = por %p225, %p226
      %p228 = scmp.ne.s32.totalorder %s220, %s222
      %p229 = scmp.eq.s32.totalorder %s44, 1
      %p230 = por %p228, %p229
      %p231 = scmp.ne.s32.totalorder %s222, %s223
      %p232 = scmp.eq.s32.totalorder %s44, 0
      %p233 = por %p231, %p232
      %p234 = scmp.ne.s32.totalorder %s222, %s223
      %p235 = scmp.eq.s32.totalorder %s45, 1
      %p236 = por %p234, %p235
      %p238 = scmp.ne.s32.totalorder %s223, %s237
      %p239 = scmp.eq.s32.totalorder %s45, 0
      %p240 = por %p238, %p239
      %s242 = sadd.s32 %s241, 1
      %p245 = scmp.eq.s32.totalorder %s39, 1
      %p246 = scmp.ne.s32.totalorder %s241, %s243
      %p247 = scmp.eq.s32.totalorder %s39, 0
      %p248 = por %p246, %p247
      %p249 = scmp.ne.s32.totalorder %s241, %s243
      %p250 = scmp.eq.s32.totalorder %s44, 1
      %p251 = por %p249, %p250
      %p252 = scmp.ne.s32.totalorder %s243, %s244
      %p253 = scmp.eq.s32.totalorder %s44, 0
      %p254 = por %p252, %p253
      %p255 = scmp.ne.s32.totalorder %s243, %s244
      %p256 = scmp.eq.s32.totalorder %s45, 1
      %p257 = por %p255, %p256
      %p259 = scmp.ne.s32.totalorder %s244, %s258
      %p260 = scmp.eq.s32.totalorder %s45, 0
      %p261 = por %p259, %p260
      %s263 = sadd.s32 %s262, 1
      %p266 = scmp.eq.s32.totalorder %s39, 1
      %p267 = scmp.ne.s32.totalorder %s262, %s264
      %p268 = scmp.eq.s32.totalorder %s39, 0
      %p269 = por %p267, %p268
      %p270 = scmp.ne.s32.totalorder %s262, %s264
      %p271 = scmp.eq.s32.totalorder %s44, 1
      %p272 = por %p270, %p271
      %p273 = scmp.ne.s32.totalorder %s264, %s265
      %p274 = scmp.eq.s32.totalorder %s44, 0
      %p275 = por %p273, %p274
      %p276 = scmp.ne.s32.totalorder %s264, %s265
      %p277 = scmp.eq.s32.totalorder %s45, 1
      %p278 = por %p276, %p277
      %p280 = scmp.ne.s32.totalorder %s265, %s279
      %p281 = scmp.eq.s32.totalorder %s45, 0
      %p282 = por %p280, %p281
      %s284 = sadd.s32 %s283, 1
      %p287 = scmp.eq.s32.totalorder %s39, 1
      %p288 = scmp.ne.s32.totalorder %s283, %s285
      %p289 = scmp.eq.s32.totalorder %s39, 0
      %p290 = por %p288, %p289
      %p291 = scmp.ne.s32.totalorder %s283, %s285
      %p292 = scmp.eq.s32.totalorder %s44, 1
      %p293 = por %p291, %p292
      %p294 = scmp.ne.s32.totalorder %s285, %s286
      %p295 = scmp.eq.s32.totalorder %s44, 0
      %p296 = por %p294, %p295
      %p297 = scmp.ne.s32.totalorder %s285, %s286
      %p298 = scmp.eq.s32.totalorder %s45, 1
      %p299 = por %p297, %p298
      %p301 = scmp.ne.s32.totalorder %s286, %s300
      %p302 = scmp.eq.s32.totalorder %s45, 0
      %p303 = por %p301, %p302
      %s305 = sadd.s32 %s304, 1
      %p308 = scmp.eq.s32.totalorder %s39, 1
      %p309 = scmp.ne.s32.totalorder %s304, %s306
      %p310 = scmp.eq.s32.totalorder %s39, 0
      %p311 = por %p309, %p310
      %p312 = scmp.ne.s32.totalorder %s304, %s306
      %p313 = scmp.eq.s32.totalorder %s44, 1
      %p314 = por %p312, %p313
      %p315 = scmp.ne.s32.totalorder %s306, %s307
      %p316 = scmp.eq.s32.totalorder %s44, 0
      %p317 = por %p315, %p316
      %p318 = scmp.ne.s32.totalorder %s306, %s307
      %p319 = scmp.eq.s32.totalorder %s45, 1
      %p320 = por %p318, %p319
      %p322 = scmp.ne.s32.totalorder %s307, %s321
      %p323 = scmp.eq.s32.totalorder %s45, 0
      %p324 = por %p322, %p323
      %s326 = sadd.s32 %s325, 1
      %p329 = scmp.eq.s32.totalorder %s39, 1
      %p330 = scmp.ne.s32.totalorder %s325, %s327
      %p331 = scmp.eq.s32.totalorder %s39, 0
      %p332 = por %p330, %p331
      %p333 = scmp.ne.s32.totalorder %s325, %s327
      %p334 = scmp.eq.s32.totalorder %s44, 1
      %p335 = por %p333, %p334
      %p336 = scmp.ne.s32.totalorder %s327, %s328
      %p337 = scmp.eq.s32.totalorder %s44, 0
      %p338 = por %p336, %p337
      %p339 = scmp.ne.s32.totalorder %s327, %s328
      %p340 = scmp.eq.s32.totalorder %s45, 1
      %p341 = por %p339, %p340
      %p343 = scmp.ne.s32.totalorder %s328, %s342
      %p344 = scmp.eq.s32.totalorder %s45, 0
      %p345 = por %p343, %p344
      %s347 = sadd.s32 %s346, 1
      %p350 = scmp.eq.s32.totalorder %s39, 1
      %p351 = scmp.ne.s32.totalorder %s346, %s348
      %p352 = scmp.eq.s32.totalorder %s39, 0
      %p353 = por %p351, %p352
      %p354 = scmp.ne.s32.totalorder %s346, %s348
      %p355 = scmp.eq.s32.totalorder %s44, 1
      %p356 = por %p354, %p355
      %p357 = scmp.ne.s32.totalorder %s348, %s349
      %p358 = scmp.eq.s32.totalorder %s44, 0
      %p359 = por %p357, %p358
      %p360 = scmp.ne.s32.totalorder %s348, %s349
      %p361 = scmp.eq.s32.totalorder %s45, 1
      %p362 = por %p360, %p361
      %p364 = scmp.ne.s32.totalorder %s349, %s363
      %p365 = scmp.eq.s32.totalorder %s45, 0
      %p366 = por %p364, %p365
      %s368 = sadd.s32 %s367, 1
      %p371 = scmp.eq.s32.totalorder %s39, 1
      %p372 = scmp.ne.s32.totalorder %s367, %s369
      %p373 = scmp.eq.s32.totalorder %s39, 0
      %p374 = por %p372, %p373
      %p375 = scmp.ne.s32.totalorder %s367, %s369
      %p376 = scmp.eq.s32.totalorder %s44, 1
      %p377 = por %p375, %p376
      %p378 = scmp.ne.s32.totalorder %s369, %s370
      %p379 = scmp.eq.s32.totalorder %s44, 0
      %p380 = por %p378, %p379
      %p381 = scmp.ne.s32.totalorder %s369, %s370
      %p382 = scmp.eq.s32.totalorder %s45, 1
      %p383 = por %p381, %p382
      %p385 = scmp.ne.s32.totalorder %s370, %s384
      %p386 = scmp.eq.s32.totalorder %s45, 0
      %p387 = por %p385, %p386
      %s388 = ssub.s32 %s39, %s46
      %p389 = scmp.eq.s32.totalorder %s388, 0
      %s391 = sadd.s32 %s390, 1
      %s392 = scalar_select %p389, %s390, %s391
      %p395 = pneg %p389
      %p396 = scmp.eq.s32.totalorder %s39, 1
      %p397 = por %p395, %p396
      %p398 = scmp.ne.s32.totalorder %s390, %s393
      %p399 = scmp.eq.s32.totalorder %s39, 0
      %p400 = por %p398, %p399
      %p401 = scmp.ne.s32.totalorder %s390, %s393
      %p402 = scmp.eq.s32.totalorder %s44, 1
      %p403 = por %p401, %p402
      %p404 = scmp.ne.s32.totalorder %s393, %s394
      %p405 = scmp.eq.s32.totalorder %s44, 0
      %p406 = por %p404, %p405
      %p407 = scmp.ne.s32.totalorder %s393, %s394
      %p408 = scmp.eq.s32.totalorder %s45, 1
      %p409 = por %p407, %p408
      %p411 = scmp.ne.s32.totalorder %s394, %s410
      %p412 = scmp.eq.s32.totalorder %s45, 0
      %p413 = por %p411, %p412
      %s414 = ssub.s32 %s39, %s46
      %p415 = scmp.eq.s32.totalorder %s414, 0
      %s417 = sadd.s32 %s416, 1
      %s418 = scalar_select %p415, %s416, %s417
      %p421 = pneg %p415
      %p422 = scmp.eq.s32.totalorder %s39, 1
      %p423 = por %p421, %p422
      %p424 = scmp.ne.s32.totalorder %s416, %s419
      %p425 = scmp.eq.s32.totalorder %s39, 0
      %p426 = por %p424, %p425
      %p427 = scmp.ne.s32.totalorder %s416, %s419
      %p428 = scmp.eq.s32.totalorder %s44, 1
      %p429 = por %p427, %p428
      %p430 = scmp.ne.s32.totalorder %s419, %s420
      %p431 = scmp.eq.s32.totalorder %s44, 0
      %p432 = por %p430, %p431
      %p433 = scmp.ne.s32.totalorder %s419, %s420
      %p434 = scmp.eq.s32.totalorder %s45, 1
      %p435 = por %p433, %p434
      %p437 = scmp.ne.s32.totalorder %s420, %s436
      %p438 = scmp.eq.s32.totalorder %s45, 0
      %p439 = por %p437, %p438
      %s440 = ssub.s32 %s39, %s46
      %p441 = scmp.eq.s32.totalorder %s440, 0
      %s443 = sadd.s32 %s442, 1
      %s444 = scalar_select %p441, %s442, %s443
      %p447 = pneg %p441
      %p448 = scmp.eq.s32.totalorder %s39, 1
      %p449 = por %p447, %p448
      %p450 = scmp.ne.s32.totalorder %s442, %s445
      %p451 = scmp.eq.s32.totalorder %s39, 0
      %p452 = por %p450, %p451
      %p453 = scmp.ne.s32.totalorder %s442, %s445
      %p454 = scmp.eq.s32.totalorder %s44, 1
      %p455 = por %p453, %p454
      %p456 = scmp.ne.s32.totalorder %s445, %s446
      %p457 = scmp.eq.s32.totalorder %s44, 0
      %p458 = por %p456, %p457
      %p459 = scmp.ne.s32.totalorder %s445, %s446
      %p460 = scmp.eq.s32.totalorder %s45, 1
      %p461 = por %p459, %p460
      %p463 = scmp.ne.s32.totalorder %s446, %s462
      %p464 = scmp.eq.s32.totalorder %s45, 0
      %p465 = por %p463, %p464
      %s466 = ssub.s32 %s39, %s46
      %p467 = scmp.eq.s32.totalorder %s466, 0
      %s469 = sadd.s32 %s468, 1
      %s470 = scalar_select %p467, %s468, %s469
      %p473 = pneg %p467
      %p474 = scmp.eq.s32.totalorder %s39, 1
      %p475 = por %p473, %p474
      %p476 = scmp.ne.s32.totalorder %s468, %s471
      %p477 = scmp.eq.s32.totalorder %s39, 0
      %p478 = por %p476, %p477
      %p479 = scmp.ne.s32.totalorder %s468, %s471
      %p480 = scmp.eq.s32.totalorder %s44, 1
      %p481 = por %p479, %p480
      %p482 = scmp.ne.s32.totalorder %s471, %s472
      %p483 = scmp.eq.s32.totalorder %s44, 0
      %p484 = por %p482, %p483
      %p485 = scmp.ne.s32.totalorder %s471, %s472
      %p486 = scmp.eq.s32.totalorder %s45, 1
      %p487 = por %p485, %p486
      %p489 = scmp.ne.s32.totalorder %s472, %s488
      %p490 = scmp.eq.s32.totalorder %s45, 0
      %p491 = por %p489, %p490
      %s492 = ssub.s32 %s39, %s46
      %p493 = scmp.eq.s32.totalorder %s492, 0
      %s495 = sadd.s32 %s494, 1
      %s496 = scalar_select %p493, %s494, %s495
      %p499 = pneg %p493
      %p500 = scmp.eq.s32.totalorder %s39, 1
      %p501 = por %p499, %p500
      %p502 = scmp.ne.s32.totalorder %s494, %s497
      %p503 = scmp.eq.s32.totalorder %s39, 0
      %p504 = por %p502, %p503
      %p505 = scmp.ne.s32.totalorder %s494, %s497
      %p506 = scmp.eq.s32.totalorder %s44, 1
      %p507 = por %p505, %p506
      %p508 = scmp.ne.s32.totalorder %s497, %s498
      %p509 = scmp.eq.s32.totalorder %s44, 0
      %p510 = por %p508, %p509
      %p511 = scmp.ne.s32.totalorder %s497, %s498
      %p512 = scmp.eq.s32.totalorder %s45, 1
      %p513 = por %p511, %p512
      %p515 = scmp.ne.s32.totalorder %s498, %s514
      %p516 = scmp.eq.s32.totalorder %s45, 0
      %p517 = por %p515, %p516
      %s518 = ssub.s32 %s39, %s46
      %p519 = scmp.eq.s32.totalorder %s518, 0
      %s521 = sadd.s32 %s520, 1
      %s522 = scalar_select %p519, %s520, %s521
      %p525 = pneg %p519
      %p526 = scmp.eq.s32.totalorder %s39, 1
      %p527 = por %p525, %p526
      %p528 = scmp.ne.s32.totalorder %s520, %s523
      %p529 = scmp.eq.s32.totalorder %s39, 0
      %p530 = por %p528, %p529
      %p531 = scmp.ne.s32.totalorder %s520, %s523
      %p532 = scmp.eq.s32.totalorder %s44, 1
      %p533 = por %p531, %p532
      %p534 = scmp.ne.s32.totalorder %s523, %s524
      %p535 = scmp.eq.s32.totalorder %s44, 0
      %p536 = por %p534, %p535
      %p537 = scmp.ne.s32.totalorder %s523, %s524
      %p538 = scmp.eq.s32.totalorder %s45, 1
      %p539 = por %p537, %p538
      %p541 = scmp.ne.s32.totalorder %s524, %s540
      %p542 = scmp.eq.s32.totalorder %s45, 0
      %p543 = por %p541, %p542
      %p544 = scmp.le.s32.totalorder 1, %s39
      %p545 = scmp.lt.s32.totalorder %s39, 3
      %p546 = pnand %p544, %p545
      %p547 = pneg %p546
      // Predicated region
      $region9: #{tpu_custom_call.1} parent=5 // pred_check
        _
      $region10: #{tpu_custom_call.1} parent=5 // pred_check_branch
        %549 = sbr.rel (%p546) target = $region12
      $region11: #{tpu_custom_call.1} parent=5 // pred_region
        %s550 = ssub.s32 %s39, 1
        // Predicated region
        $region13: #{tpu_custom_call.1} parent=11 // pred_check
          %p551 = pneg %p86
        $region14: #{tpu_custom_call.1} parent=11 // pred_check_branch
          %553 = sbr.rel (%p551) target = $region16
        $region15: #{tpu_custom_call.1} parent=11 // pred_region
          _
        $region16: #{tpu_custom_call.1} parent=11 // pred_fallthru
          _
        // Predicated region
        $region17: #{tpu_custom_call.1} parent=11 // pred_check
          %p554 = pneg %p107
        $region18: #{tpu_custom_call.1} parent=11 // pred_check_branch
          %556 = sbr.rel (%p554) target = $region20
        $region19: #{tpu_custom_call.1} parent=11 // pred_region
          _
        $region20: #{tpu_custom_call.1} parent=11 // pred_fallthru
          _
        // Predicated region
        $region21: #{tpu_custom_call.1} parent=11 // pred_check
          %p557 = pneg %p128
        $region22: #{tpu_custom_call.1} parent=11 // pred_check_branch
          %559 = sbr.rel (%p557) target = $region24
        $region23: #{tpu_custom_call.1} parent=11 // pred_region
          _
        $region24: #{tpu_custom_call.1} parent=11 // pred_fallthru
          _
        // Predicated region
        $region25: #{tpu_custom_call.1} parent=11 // pred_check
          %p560 = pneg %p149
        $region26: #{tpu_custom_call.1} parent=11 // pred_check_branch
          %562 = sbr.rel (%p560) target = $region28
        $region27: #{tpu_custom_call.1} parent=11 // pred_region
          _
        $region28: #{tpu_custom_call.1} parent=11 // pred_fallthru
          _
        // Predicated region
        $region29: #{tpu_custom_call.1} parent=11 // pred_check
          %p563 = pneg %p170
        $region30: #{tpu_custom_call.1} parent=11 // pred_check_branch
          %565 = sbr.rel (%p563) target = $region32
        $region31: #{tpu_custom_call.1} parent=11 // pred_region
          _
        $region32: #{tpu_custom_call.1} parent=11 // pred_fallthru
          _
        // Predicated region
        $region33: #{tpu_custom_call.1} parent=11 // pred_check
          %p566 = pneg %p191
        $region34: #{tpu_custom_call.1} parent=11 // pred_check_branch
          %568 = sbr.rel (%p566) target = $region36
        $region35: #{tpu_custom_call.1} parent=11 // pred_region
          _
        $region36: #{tpu_custom_call.1} parent=11 // pred_fallthru
          _
        // Predicated region
        $region37: #{tpu_custom_call.1} parent=11 // pred_check
          %p569 = pneg %p212
        $region38: #{tpu_custom_call.1} parent=11 // pred_check_branch
          %571 = sbr.rel (%p569) target = $region40
        $region39: #{tpu_custom_call.1} parent=11 // pred_region
          _
        $region40: #{tpu_custom_call.1} parent=11 // pred_fallthru
          _
        // Predicated region
        $region41: #{tpu_custom_call.1} parent=11 // pred_check
          %p572 = pneg %p233
        $region42: #{tpu_custom_call.1} parent=11 // pred_check_branch
          %574 = sbr.rel (%p572) target = $region44
        $region43: #{tpu_custom_call.1} parent=11 // pred_region
          %576 = vsyncadd [#allocation6], 0
          %s578 = sshll.u32 %s8, 4
          %s579 = int_to_ptr.hbm [resolvable:$true] %s578
          %s580 = sshll.u32 [#allocation5], 4
          %s581 = int_to_ptr.vmem [resolvable:$true] %s580
          %583 = dma.hbm_to_vmem [thread:$0]  %s579, 16, %s581, [#allocation6]
        $region44: #{tpu_custom_call.1} parent=11 // pred_fallthru
          _
        // Predicated region
        $region45: #{tpu_custom_call.1} parent=11 // pred_check
          %p584 = pneg %p254
        $region46: #{tpu_custom_call.1} parent=11 // pred_check_branch
          %586 = sbr.rel (%p584) target = $region48
        $region47: #{tpu_custom_call.1} parent=11 // pred_region
          %588 = vsyncadd [#allocation6], 0
          %s589 = sshll.u32 %s9, 4
          %s590 = int_to_ptr.hbm [resolvable:$true] %s589
          %s591 = sshll.u32 [#allocation7], 4
          %s592 = int_to_ptr.vmem [resolvable:$true] %s591
          %597 = dma.hbm_to_vmem [thread:$0]  %s590, 512, %s592, [#allocation6], 128, 128, 8
        $region48: #{tpu_custom_call.1} parent=11 // pred_fallthru
          _
        // Predicated region
        $region49: #{tpu_custom_call.1} parent=11 // pred_check
          %p598 = pneg %p275
        $region50: #{tpu_custom_call.1} parent=11 // pred_check_branch
          %600 = sbr.rel (%p598) target = $region52
        $region51: #{tpu_custom_call.1} parent=11 // pred_region
          _
        $region52: #{tpu_custom_call.1} parent=11 // pred_fallthru
          _
        // Predicated region
        $region53: #{tpu_custom_call.1} parent=11 // pred_check
          %p601 = pneg %p296
        $region54: #{tpu_custom_call.1} parent=11 // pred_check_branch
          %603 = sbr.rel (%p601) target = $region56
        $region55: #{tpu_custom_call.1} parent=11 // pred_region
          %605 = vsyncadd [#allocation9], 0
          %s606 = sshll.u32 %s11, 4
          %s607 = int_to_ptr.hbm [resolvable:$true] %s606
          %s608 = sshll.u32 [#allocation8], 4
          %s609 = int_to_ptr.vmem [resolvable:$true] %s608
          %614 = dma.hbm_to_vmem [thread:$0]  %s607, 512, %s609, [#allocation9], 128, 128, 8
        $region56: #{tpu_custom_call.1} parent=11 // pred_fallthru
          _
        // Predicated region
        $region57: #{tpu_custom_call.1} parent=11 // pred_check
          %p615 = pneg %p317
        $region58: #{tpu_custom_call.1} parent=11 // pred_check_branch
          %617 = sbr.rel (%p615) target = $region60
        $region59: #{tpu_custom_call.1} parent=11 // pred_region
          _
        $region60: #{tpu_custom_call.1} parent=11 // pred_fallthru
          _
        // Predicated region
        $region61: #{tpu_custom_call.1} parent=11 // pred_check
          %p618 = pneg %p338
        $region62: #{tpu_custom_call.1} parent=11 // pred_check_branch
          %620 = sbr.rel (%p618) target = $region64
        $region63: #{tpu_custom_call.1} parent=11 // pred_region
          _
        $region64: #{tpu_custom_call.1} parent=11 // pred_fallthru
          _
        // Predicated region
        $region65: #{tpu_custom_call.1} parent=11 // pred_check
          %p621 = pneg %p359
        $region66: #{tpu_custom_call.1} parent=11 // pred_check_branch
          %623 = sbr.rel (%p621) target = $region68
        $region67: #{tpu_custom_call.1} parent=11 // pred_region
          _
        $region68: #{tpu_custom_call.1} parent=11 // pred_fallthru
          _
        // Predicated region
        $region69: #{tpu_custom_call.1} parent=11 // pred_check
          %p624 = pneg %p380
        $region70: #{tpu_custom_call.1} parent=11 // pred_check_branch
          %626 = sbr.rel (%p624) target = $region72
        $region71: #{tpu_custom_call.1} parent=11 // pred_region
          _
        $region72: #{tpu_custom_call.1} parent=11 // pred_fallthru
          _
      $region12: #{tpu_custom_call.1} parent=5 // pred_fallthru
        _
      %p627 = scmp.lt.s32.totalorder %s39, 2
      // Predicated region
      $region73: #{tpu_custom_call.1} parent=5 // pred_check
        %p628 = pneg %p627
      $region74: #{tpu_custom_call.1} parent=5 // pred_check_branch
        %630 = sbr.rel (%p628) target = $region76
      $region75: #{tpu_custom_call.1} parent=5 // pred_region
        // Predicated region
        $region77: #{tpu_custom_call.1} parent=75 // pred_check
          %p631 = pneg %p59
        $region78: #{tpu_custom_call.1} parent=75 // pred_check_branch
          %633 = sbr.rel (%p631) target = $region80
        $region79: #{tpu_custom_call.1} parent=75 // pred_region
          %s634 = sand.u32 %s39, 1
          %s635 = scalar_lea.sflag [#allocation3], %s634
          %s636 = sand.u32 %s49, 1
          %s637 = smul.addr %s636, 8
          %s638 = scalar_lea.vmem [#allocation2], %s637
          %640 = vsyncadd %s635, 0
          %s641 = smul.addr %s39, 8
          %s642 = scalar_lea.hbm %s0, %s641
          %s644 = sshll.u32 %s642, 4
          %s645 = int_to_ptr.hbm [resolvable:$true] %s644
          %s646 = sshll.u32 %s638, 4
          %s647 = int_to_ptr.vmem [resolvable:$true] %s646
          %649 = dma.hbm_to_vmem [thread:$0]  %s645, 128, %s647, %s635
        $region80: #{tpu_custom_call.1} parent=75 // pred_fallthru
          _
        // Predicated region
        $region81: #{tpu_custom_call.1} parent=75 // pred_check
          %p650 = pneg %p400
        $region82: #{tpu_custom_call.1} parent=75 // pred_check_branch
          %652 = sbr.rel (%p650) target = $region84
        $region83: #{tpu_custom_call.1} parent=75 // pred_region
          %p653 = scmp.lt.s32.totalorder %s39, 1
          %s654 = scalar_select %p653, %s39, 1
          %s655 = smul.addr %s654, 8
          %s656 = scalar_lea.vmem %s16, %s655
        $region84: #{tpu_custom_call.1} parent=75 // pred_fallthru
          _
        // Predicated region
        $region85: #{tpu_custom_call.1} parent=75 // pred_check
          %p657 = pneg %p426
        $region86: #{tpu_custom_call.1} parent=75 // pred_check_branch
          %659 = sbr.rel (%p657) target = $region88
        $region87: #{tpu_custom_call.1} parent=75 // pred_region
          %p660 = scmp.lt.s32.totalorder %s39, 1
          %s661 = scalar_select %p660, %s39, 1
          %s662 = smul.addr %s661, 8
          %s663 = scalar_lea.vmem %s17, %s662
        $region88: #{tpu_custom_call.1} parent=75 // pred_fallthru
          _
        // Predicated region
        $region89: #{tpu_custom_call.1} parent=75 // pred_check
          %p664 = pneg %p452
        $region90: #{tpu_custom_call.1} parent=75 // pred_check_branch
          %666 = sbr.rel (%p664) target = $region92
        $region91: #{tpu_custom_call.1} parent=75 // pred_region
          %s667 = sand.u32 %s39, 1
          %s668 = scalar_lea.sflag [#allocation3], %s667
          %s669 = sand.u32 %s442, 1
          %s670 = smul.addr %s669, 8
          %s671 = scalar_lea.vmem [#allocation10], %s670
          %673 = vsyncadd %s668, 0
          %s674 = smul.addr %s39, 8
          %s675 = scalar_lea.hbm %s18, %s674
          %s677 = sshll.u32 %s675, 4
          %s678 = int_to_ptr.hbm [resolvable:$true] %s677
          %s679 = sshll.u32 %s671, 4
          %s680 = int_to_ptr.vmem [resolvable:$true] %s679
          %682 = dma.hbm_to_vmem [thread:$0]  %s678, 128, %s680, %s668
        $region92: #{tpu_custom_call.1} parent=75 // pred_fallthru
          _
      $region76: #{tpu_custom_call.1} parent=5 // pred_fallthru
        _
      %p683 = scmp.le.s32.totalorder 1, %s39
      %p684 = scmp.lt.s32.totalorder %s39, 3
      %p685 = pnand %p683, %p684
      %p686 = pneg %p685
      // Predicated region
      $region93: #{tpu_custom_call.1} parent=5 // pred_check
        _
      $region94: #{tpu_custom_call.1} parent=5 // pred_check_branch
        %688 = sbr.rel (%p685) target = $region96
      $region95: #{tpu_custom_call.1} parent=5 // pred_region
        %s689 = ssub.s32 %s39, 1
        %s690 = sand.u32 %s44, 1
        %s691 = scalar_lea.sflag [#allocation3], %s690
        %s692 = sand.u32 %s52, 1
        %s693 = smul.addr %s692, 8
        %s694 = scalar_lea.vmem [#allocation2], %s693
        // Predicated region
        $region97: #{tpu_custom_call.1} parent=95 // pred_check
          %p695 = pneg %p65
        $region98: #{tpu_custom_call.1} parent=95 // pred_check_branch
          %697 = sbr.rel (%p695) target = $region100
        $region99: #{tpu_custom_call.1} parent=95 // pred_region
          %699 = dma.done %s691, 128
        $region100: #{tpu_custom_call.1} parent=95 // pred_fallthru
          _
        // Predicated region
        $region101: #{tpu_custom_call.1} parent=95 // pred_check
          %p700 = pneg %p233
        $region102: #{tpu_custom_call.1} parent=95 // pred_check_branch
          %702 = sbr.rel (%p700) target = $region104
        $region103: #{tpu_custom_call.1} parent=95 // pred_region
          %704 = dma.done [#allocation6], 16
        $region104: #{tpu_custom_call.1} parent=95 // pred_fallthru
          _
        // Predicated region
        $region105: #{tpu_custom_call.1} parent=95 // pred_check
          %p705 = pneg %p254
        $region106: #{tpu_custom_call.1} parent=95 // pred_check_branch
          %707 = sbr.rel (%p705) target = $region108
        $region107: #{tpu_custom_call.1} parent=95 // pred_region
          %709 = dma.done [#allocation6], 512
        $region108: #{tpu_custom_call.1} parent=95 // pred_fallthru
          _
        // Predicated region
        $region109: #{tpu_custom_call.1} parent=95 // pred_check
          %p710 = pneg %p296
        $region110: #{tpu_custom_call.1} parent=95 // pred_check_branch
          %712 = sbr.rel (%p710) target = $region112
        $region111: #{tpu_custom_call.1} parent=95 // pred_region
          %714 = dma.done [#allocation9], 512
        $region112: #{tpu_custom_call.1} parent=95 // pred_fallthru
          _
        %s715 = sand.u32 %s44, 1
        %s716 = scalar_lea.sflag [#allocation3], %s715
        %s717 = sand.u32 %s445, 1
        %s718 = smul.addr %s717, 8
        %s719 = scalar_lea.vmem [#allocation10], %s718
        // Predicated region
        $region113: #{tpu_custom_call.1} parent=95 // pred_check
          %p720 = pneg %p458
        $region114: #{tpu_custom_call.1} parent=95 // pred_check_branch
          %722 = sbr.rel (%p720) target = $region116
        $region115: #{tpu_custom_call.1} parent=95 // pred_region
          %724 = dma.done %s716, 128
        $region116: #{tpu_custom_call.1} parent=95 // pred_fallthru
          _
        %s725 = sand.u32 %s44, 1
        %s726 = scalar_lea.sflag [#allocation3], %s725
        %s727 = sand.u32 %s52, 1
        %s728 = smul.addr %s727, 8
        %s729 = scalar_lea.vmem [#allocation2], %s728
        %p730 = pneg %p65
        %p731 = pneg %p62
        %p732 = pneg %p86
        %p733 = pneg %p83
        %p734 = pneg %p107
        %p735 = pneg %p104
        %p736 = pneg %p128
        %p737 = pneg %p125
        %p738 = pneg %p149
        %p739 = pneg %p146
        %p740 = pneg %p170
        %p741 = pneg %p167
        %p742 = pneg %p191
        %p743 = pneg %p188
        %p744 = pneg %p212
        %p745 = pneg %p209
        %p746 = pneg %p233
        %p747 = pneg %p230
        %p748 = pneg %p254
        %p749 = pneg %p251
        %p750 = pneg %p275
        %p751 = pneg %p272
        %p752 = pneg %p296
        %p753 = pneg %p293
        %p754 = pneg %p317
        %p755 = pneg %p314
        %p756 = pneg %p338
        %p757 = pneg %p335
        %p758 = pneg %p359
        %p759 = pneg %p356
        %p760 = pneg %p380
        %p761 = pneg %p377
        %p762 = scmp.lt.s32.totalorder %s44, 1
        %s763 = scalar_select %p762, %s44, 1
        %s764 = smul.addr %s763, 8
        %s765 = scalar_lea.vmem %s16, %s764
        %p766 = pneg %p406
        %p767 = pneg %p403
        %p768 = scmp.lt.s32.totalorder %s44, 1
        %s769 = scalar_select %p768, %s44, 1
        %s770 = smul.addr %s769, 8
        %s771 = scalar_lea.vmem %s17, %s770
        %p772 = pneg %p432
        %p773 = pneg %p429
        %s774 = sand.u32 %s44, 1
        %s775 = scalar_lea.sflag [#allocation3], %s774
        %s776 = sand.u32 %s445, 1
        %s777 = smul.addr %s776, 8
        %s778 = scalar_lea.vmem [#allocation10], %s777
        %p779 = pneg %p458
        %p780 = pneg %p455
        %p781 = pneg %p484
        %p782 = pneg %p481
        %s783 = sand.u32 %s471, 1
        %s784 = scalar_lea.sflag [#allocation4], %s783
        %s785 = sand.u32 %s471, 1
        %s786 = smul.addr %s785, 8
        %s787 = scalar_lea.vmem [#allocation11], %s786
        %p788 = pneg %p510
        %p789 = pneg %p507
        %p790 = scmp.lt.s32.totalorder %s44, 1
        %s791 = scalar_select %p790, %s44, 1
        %s792 = smul.addr %s791, 8
        %s793 = scalar_lea.vmem %s20, %s792
        %p794 = pneg %p536
        %p795 = pneg %p533
        %s796 = sand.u32 %s523, 1
        %s797 = scalar_lea.sflag [#allocation13], %s796
        %s798 = sand.u32 %s523, 1
        %s799 = smul.addr %s798, 8
        %s800 = scalar_lea.vmem [#allocation12], %s799
        %p801 = scmp.lt.s32.totalorder %s44, 1
        %s802 = scalar_select %p801, %s44, 1
        %s803 = smul.addr %s802, 8
        %s804 = scalar_lea.vmem %s16, %s803
        %p805 = scmp.lt.s32.totalorder %s44, 1
        %s806 = scalar_select %p805, %s44, 1
        %s807 = smul.addr %s806, 8
        %s808 = scalar_lea.vmem %s17, %s807
        %p809 = scmp.lt.s32.totalorder %s44, 1
        %s810 = scalar_select %p809, %s44, 1
        %s811 = smul.addr %s810, 8
        %s812 = scalar_lea.vmem %s20, %s811
        %v813 = vld [vmem:[%s694] sm:$0xff]
        %v814 = vld [vmem:[%s1] sm:$0xff]
        %v815 = vld [vmem:[%s1 + $0x8] sm:$0xff]
        %v816 = vld [vmem:[%s1 + $0x10] sm:$0xff]
        %v817 = vld [vmem:[%s1 + $0x18] sm:$0xff]
        %v818 = vld [vmem:[%s2] sm:$0x1]
        %v820 = vperm.slane %v818, 0
        %vm822 = vcmask 261120
        %v824 = vsel %vm822, %v813, 0
        %826 = vmatpush.msra.mxu0 0.0
        %827 = vmatpush.msra.mxu0 0.0
        %828 = vmatpush.msra.mxu0 0.0
        %829 = vmatpush.msra.mxu0 0.0
        %830 = vmatpush.msra.mxu0 0.0
        %831 = vmatpush.msra.mxu0 0.0
        %832 = vmatpush.msra.mxu0 0.0
        %833 = vmatpush.msra.mxu0 0.0
        %834 = vmatpush.msra.mxu0 0.0
        %835 = vmatpush.msra.mxu0 0.0
        %836 = vmatpush.msra.mxu0 0.0
        %837 = vmatpush.msra.mxu0 0.0
        %838 = vmatpush.msra.mxu0 %v817
        %839 = vmatpush.msra.mxu0 %v816
        %840 = vmatpush.msra.mxu0 %v815
        %841 = vmatpush.msra.mxu0 %v814
        %842 = vmatmul.f32.gmra.mxu0 %v824
        %v843 = vpop.f32.mrf.mxu0
        %v844 = vadd.f32 %v820, %v843
        %845 = vdwg.mxu0
        %v846 = vmax.f32 %v844, 0.0
        %v847 = vld [vmem:[%s3] sm:$0xff]
        %v848 = vld [vmem:[%s3 + $0x8] sm:$0xff]
        %v849 = vld [vmem:[%s3 + $0x10] sm:$0xff]
        %v850 = vld [vmem:[%s3 + $0x18] sm:$0xff]
        %v851 = vld [vmem:[%s4] sm:$0x1]
        %v853 = vperm.slane %v851, 0
        %v856 = vsel %vm822, %v846, 0
        %858 = vmatpush.msra.mxu0 0.0
        %859 = vmatpush.msra.mxu0 0.0
        %860 = vmatpush.msra.mxu0 0.0
        %861 = vmatpush.msra.mxu0 0.0
        %862 = vmatpush.msra.mxu0 0.0
        %863 = vmatpush.msra.mxu0 0.0
        %864 = vmatpush.msra.mxu0 0.0
        %865 = vmatpush.msra.mxu0 0.0
        %866 = vmatpush.msra.mxu0 0.0
        %867 = vmatpush.msra.mxu0 0.0
        %868 = vmatpush.msra.mxu0 0.0
        %869 = vmatpush.msra.mxu0 0.0
        %870 = vmatpush.msra.mxu0 %v850
        %871 = vmatpush.msra.mxu0 %v849
        %872 = vmatpush.msra.mxu0 %v848
        %873 = vmatpush.msra.mxu0 %v847
        %874 = vmatmul.f32.gmra.mxu0 %v856
        %v875 = vpop.f32.mrf.mxu0
        %v876 = vadd.f32 %v853, %v875
        %877 = vdwg.mxu0
        %v878 = vsub.f32 0.0, %v876
        %v879 = vmul.f32 %v878, 1.442695
        %v880 = vpow.pop %v879
        %v881 = vadd.f32 %v880, 1.0
        %v882 = vrcp.pop %v881
        %vm883 = vcmask 31744
        %884 = vst.msk [vmem:[%s812] sm:$0xff] %vm883, %v882
        %v885 = vld [vmem:[%s804] sm:$0xff]
        %v886 = vlog2.pop %v885
        %v887 = vmul.f32 %v886, 0.6931472
        %v888 = vsub.f32 0.0, %v887
        %v889 = vld [vmem:[%s808] sm:$0xff]
        %v890 = vlog2.pop %v889
        %v891 = vmul.f32 %v890, 0.6931472
        %v892 = vsub.f32 0.0, %v891
        %v893 = vmul.f32 %v882, %v892
        %v894 = vsub.f32 1.0, %v882
        %v895 = vmul.f32 %v894, %v888
        %v896 = vadd.f32 %v893, %v895
        %v897 = vrcp.pop %v896
        %v898 = vmul.f32 %v893, %v897
        %v899 = vld [vmem:[%s5] sm:$0xff]
        %v900 = vld [vmem:[%s5 + $0x8] sm:$0xff]
        %v901 = vld [vmem:[%s5 + $0x10] sm:$0xff]
        %v902 = vld [vmem:[%s5 + $0x18] sm:$0xff]
        %v903 = vld [vmem:[%s6] sm:$0x1]
        %v905 = vperm.slane %v903, 0
        %907 = vmatpush.msra.mxu0 0.0
        %908 = vmatpush.msra.mxu0 0.0
        %909 = vmatpush.msra.mxu0 0.0
        %910 = vmatpush.msra.mxu0 0.0
        %911 = vmatpush.msra.mxu0 0.0
        %912 = vmatpush.msra.mxu0 0.0
        %913 = vmatpush.msra.mxu0 0.0
        %914 = vmatpush.msra.mxu0 0.0
        %915 = vmatpush.msra.mxu0 0.0
        %916 = vmatpush.msra.mxu0 0.0
        %917 = vmatpush.msra.mxu0 0.0
        %918 = vmatpush.msra.mxu0 0.0
        %919 = vmatpush.msra.mxu0 %v902
        %920 = vmatpush.msra.mxu0 %v901
        %921 = vmatpush.msra.mxu0 %v900
        %922 = vmatpush.msra.mxu0 %v899
        %923 = vmatmul.f32.gmra.mxu0 %v824
        %v924 = vpop.f32.mrf.mxu0
        %v925 = vadd.f32 %v905, %v924
        %926 = vdwg.mxu0
        %v927 = vmax.f32 %v925, 0.0
        %v928 = vld [vmem:[%s7] sm:$0xff]
        %v929 = vld [vmem:[%s7 + $0x8] sm:$0xff]
        %v930 = vld [vmem:[%s7 + $0x10] sm:$0xff]
        %v931 = vld [vmem:[%s7 + $0x18] sm:$0xff]
        %v932 = vld [vmem:[#allocation5] sm:$0x1]
        %v934 = vperm.slane %v932, 0
        %v937 = vsel %vm822, %v927, 0
        %939 = vmatpush.msra.mxu0 0.0
        %940 = vmatpush.msra.mxu0 0.0
        %941 = vmatpush.msra.mxu0 0.0
        %942 = vmatpush.msra.mxu0 0.0
        %943 = vmatpush.msra.mxu0 0.0
        %944 = vmatpush.msra.mxu0 0.0
        %945 = vmatpush.msra.mxu0 0.0
        %946 = vmatpush.msra.mxu0 0.0
        %947 = vmatpush.msra.mxu0 0.0
        %948 = vmatpush.msra.mxu0 0.0
        %949 = vmatpush.msra.mxu0 0.0
        %950 = vmatpush.msra.mxu0 0.0
        %951 = vmatpush.msra.mxu0 %v931
        %952 = vmatpush.msra.mxu0 %v930
        %953 = vmatpush.msra.mxu0 %v929
        %954 = vmatpush.msra.mxu0 %v928
        %955 = vmatmul.f32.gmra.mxu0 %v937
        %v956 = vpop.f32.mrf.mxu0
        %v957 = vadd.f32 %v934, %v956
        %958 = vdwg.mxu0
        %v959 = vmax.f32 %v957, 0.0
        %v960 = vld [vmem:[#allocation7] sm:$0xff]
        %v961 = vld [vmem:[#allocation7 + $0x8] sm:$0xff]
        %v962 = vld [vmem:[#allocation7 + $0x10] sm:$0xff]
        %v963 = vld [vmem:[#allocation7 + $0x18] sm:$0xff]
        %v964 = vld [vmem:[%s10] sm:$0x1]
        %v966 = vperm.slane %v964, 0
        %v969 = vsel %vm822, %v959, 0
        %971 = vmatpush.msra.mxu0 0.0
        %972 = vmatpush.msra.mxu0 0.0
        %973 = vmatpush.msra.mxu0 0.0
        %974 = vmatpush.msra.mxu0 0.0
        %975 = vmatpush.msra.mxu0 0.0
        %976 = vmatpush.msra.mxu0 0.0
        %977 = vmatpush.msra.mxu0 0.0
        %978 = vmatpush.msra.mxu0 0.0
        %979 = vmatpush.msra.mxu0 0.0
        %980 = vmatpush.msra.mxu0 0.0
        %981 = vmatpush.msra.mxu0 0.0
        %982 = vmatpush.msra.mxu0 0.0
        %983 = vmatpush.msra.mxu0 %v963
        %984 = vmatpush.msra.mxu0 %v962
        %985 = vmatpush.msra.mxu0 %v961
        %986 = vmatpush.msra.mxu0 %v960
        %987 = vmatmul.f32.gmra.mxu0 %v969
        %v988 = vpop.f32.mrf.mxu0
        %v989 = vadd.f32 %v966, %v988
        %990 = vdwg.mxu0
        %v991 = vmax.f32 %v989, 0.0
        %v992 = vld [vmem:[#allocation8] sm:$0xff]
        %v993 = vld [vmem:[#allocation8 + $0x8] sm:$0xff]
        %v994 = vld [vmem:[#allocation8 + $0x10] sm:$0xff]
        %v995 = vld [vmem:[#allocation8 + $0x18] sm:$0xff]
        %v996 = vld [vmem:[%s12] sm:$0x1]
        %v998 = vperm.slane %v996, 0
        %v1001 = vsel %vm822, %v991, 0
        %1003 = vmatpush.msra.mxu0 0.0
        %1004 = vmatpush.msra.mxu0 0.0
        %1005 = vmatpush.msra.mxu0 0.0
        %1006 = vmatpush.msra.mxu0 0.0
        %1007 = vmatpush.msra.mxu0 0.0
        %1008 = vmatpush.msra.mxu0 0.0
        %1009 = vmatpush.msra.mxu0 0.0
        %1010 = vmatpush.msra.mxu0 0.0
        %1011 = vmatpush.msra.mxu0 0.0
        %1012 = vmatpush.msra.mxu0 0.0
        %1013 = vmatpush.msra.mxu0 0.0
        %1014 = vmatpush.msra.mxu0 0.0
        %1015 = vmatpush.msra.mxu0 %v995
        %1016 = vmatpush.msra.mxu0 %v994
        %1017 = vmatpush.msra.mxu0 %v993
        %1018 = vmatpush.msra.mxu0 %v992
        %1019 = vmatmul.f32.gmra.mxu0 %v1001
        %v1020 = vpop.f32.mrf.mxu0
        %v1021 = vadd.f32 %v998, %v1020
        %1022 = vdwg.mxu0
        %1023 = vst.msk [vmem:[%s800] sm:$0xff] %vm822, %v1021
        %v1024 = vld [vmem:[%s13] sm:$0xff]
        %v1025 = vld [vmem:[%s13 + $0x8] sm:$0xff]
        %v1026 = vld [vmem:[%s13 + $0x10] sm:$0xff]
        %v1027 = vld [vmem:[%s13 + $0x18] sm:$0xff]
        %v1028 = vld [vmem:[%s14] sm:$0xf]
        %v1029 = vld [vmem:[%s719] sm:$0xff]
        %v1030 = vadd.f32 %v1021, %v1029
        %v1031 = vmul.f32 %v1030, 1.4285715
        %v1032 = vsel %vm822, %v1031, -inf
        %1033 = vmax.xlane.f32.xlu0 %v1032
        %v1034 = vpop.xlane.xlu0 %1033
        %v1035 = vsub.f32 %v1031, %v1034
        %v1036 = vmul.f32 %v1035, 1.442695
        %v1037 = vpow.pop %v1036
        %v1039 = vsel %vm822, %v1037, 0
        %1041 = vmatpush.msra.mxu0 0.0
        %1042 = vmatpush.msra.mxu0 0.0
        %1043 = vmatpush.msra.mxu0 0.0
        %1044 = vmatpush.msra.mxu0 0.0
        %1045 = vmatpush.msra.mxu0 0.0
        %1046 = vmatpush.msra.mxu0 0.0
        %1047 = vmatpush.msra.mxu0 0.0
        %1048 = vmatpush.msra.mxu0 0.0
        %1049 = vmatpush.msra.mxu0 0.0
        %1050 = vmatpush.msra.mxu0 0.0
        %1051 = vmatpush.msra.mxu0 0.0
        %1052 = vmatpush.msra.mxu0 0.0
        %1053 = vmatpush.msra.mxu0 %v1027
        %1054 = vmatpush.msra.mxu0 %v1026
        %1055 = vmatpush.msra.mxu0 %v1025
        %1056 = vmatpush.msra.mxu0 %v1024
        %1057 = vmatmul.f32.gmra.mxu0 %v1039
        %v1058 = vpop.f32.mrf.mxu0
        %v1059 = vadd.f32 0.0, %v1058
        %1060 = vdwg.mxu0
        %v1061 = vld [vmem:[%s15] sm:$0x1]
        %v1063 = vperm.slane %v1061, 0
        %v1066 = vsel %vm883, %v1059, 0
        %vm1068 = vcmask 1043456
        %v1070 = vsel %vm1068, %v1028, 0
        %1072 = vmatpush.msra.mxu0 0.0
        %1073 = vmatpush.msra.mxu0 0.0
        %1074 = vmatpush.msra.mxu0 0.0
        %1075 = vmatpush.msra.mxu0 0.0
        %1076 = vmatpush.msra.mxu0 0.0
        %1077 = vmatpush.msra.mxu0 0.0
        %1078 = vmatpush.msra.mxu0 0.0
        %1079 = vmatpush.msra.mxu0 0.0
        %1080 = vmatpush.msra.mxu0 0.0
        %1081 = vmatpush.msra.mxu0 0.0
        %1082 = vmatpush.msra.mxu0 0.0
        %1083 = vmatpush.msra.mxu0 0.0
        %1084 = vmatpush.msra.mxu0 0.0
        %1085 = vmatpush.msra.mxu0 0.0
        %1086 = vmatpush.msra.mxu0 0.0
        %1087 = vmatpush.msra.mxu0 %v1070
        %1088 = vmatmul.f32.gmra.mxu0 %v1066
        %v1089 = vpop.f32.mrf.mxu0
        %v1090 = vadd.f32 %v1063, %v1089
        %1091 = vdwg.mxu0
        %v1092 = vrcp.pop %v1090
        %v1093 = vmul.f32 %v1037, %v1092
        %v1095 = vsel %vm883, %v898, 0
        %1097 = vmatpush.msra.mxu0 0.0
        %1098 = vmatpush.msra.mxu0 0.0
        %1099 = vmatpush.msra.mxu0 0.0
        %1100 = vmatpush.msra.mxu0 0.0
        %1101 = vmatpush.msra.mxu0 0.0
        %1102 = vmatpush.msra.mxu0 0.0
        %1103 = vmatpush.msra.mxu0 0.0
        %1104 = vmatpush.msra.mxu0 0.0
        %1105 = vmatpush.msra.mxu0 0.0
        %1106 = vmatpush.msra.mxu0 0.0
        %1107 = vmatpush.msra.mxu0 0.0
        %1108 = vmatpush.msra.mxu0 0.0
        %1109 = vmatpush.msra.mxu0 0.0
        %1110 = vmatpush.msra.mxu0 0.0
        %1111 = vmatpush.msra.mxu0 0.0
        %1112 = vmatpush.msra.mxu0 %v1070
        %1113 = vmatmul.f32.gmra.mxu0 %v1095
        %v1114 = vpop.f32.mrf.mxu0
        %v1115 = vadd.f32 0.0, %v1114
        %1116 = vdwg.mxu0
        %v1117 = vmul.f32 %v1115, %v1093
        %v1118 = vsub.f32 1.0, %v1115
        %v1119 = vmul.f32 %v1118, %v813
        %v1120 = vadd.f32 %v1117, %v1119
        %1121 = vst.msk [vmem:[%s787] sm:$0xff] %vm822, %v1120
        %s1122 = sand.u32 %s471, 1
        %s1123 = scalar_lea.sflag [#allocation4], %s1122
        %s1124 = sand.u32 %s471, 1
        %s1125 = smul.addr %s1124, 8
        %s1126 = scalar_lea.vmem [#allocation11], %s1125
        %p1127 = scmp.lt.s32.totalorder %s44, 1
        %s1128 = scalar_select %p1127, %s44, 1
        %s1129 = smul.addr %s1128, 8
        %s1130 = scalar_lea.vmem %s20, %s1129
        %s1131 = sand.u32 %s523, 1
        %s1132 = scalar_lea.sflag [#allocation13], %s1131
        %s1133 = sand.u32 %s523, 1
        %s1134 = smul.addr %s1133, 8
        %s1135 = scalar_lea.vmem [#allocation12], %s1134
        // Predicated region
        $region117: #{tpu_custom_call.1} parent=95 // pred_check
          %p1136 = pneg %p481
        $region118: #{tpu_custom_call.1} parent=95 // pred_check_branch
          %1138 = sbr.rel (%p1136) target = $region120
        $region119: #{tpu_custom_call.1} parent=95 // pred_region
          %1140 = vsyncadd %s1123, 0
          %s1141 = smul.addr %s44, 8
          %s1142 = scalar_lea.hbm %s19, %s1141
          %s1144 = sshll.u32 %s1126, 4
          %s1145 = int_to_ptr.vmem [resolvable:$true] %s1144
          %s1146 = sshll.u32 %s1142, 4
          %s1147 = int_to_ptr.hbm [resolvable:$true] %s1146
          %1149 = dma.vmem_to_hbm [thread:$0]  %s1145, 128, %s1147, %s1123
        $region120: #{tpu_custom_call.1} parent=95 // pred_fallthru
          _
        // Predicated region
        $region121: #{tpu_custom_call.1} parent=95 // pred_check
          %p1150 = pneg %p507
        $region122: #{tpu_custom_call.1} parent=95 // pred_check_branch
          %1152 = sbr.rel (%p1150) target = $region124
        $region123: #{tpu_custom_call.1} parent=95 // pred_region
          _
        $region124: #{tpu_custom_call.1} parent=95 // pred_fallthru
          _
        // Predicated region
        $region125: #{tpu_custom_call.1} parent=95 // pred_check
          %p1153 = pneg %p533
        $region126: #{tpu_custom_call.1} parent=95 // pred_check_branch
          %1155 = sbr.rel (%p1153) target = $region128
        $region127: #{tpu_custom_call.1} parent=95 // pred_region
          %1157 = vsyncadd %s1132, 0
          %s1158 = smul.addr %s44, 8
          %s1159 = scalar_lea.hbm %s21, %s1158
          %s1161 = sshll.u32 %s1135, 4
          %s1162 = int_to_ptr.vmem [resolvable:$true] %s1161
          %s1163 = sshll.u32 %s1159, 4
          %s1164 = int_to_ptr.hbm [resolvable:$true] %s1163
          %1166 = dma.vmem_to_hbm [thread:$0]  %s1162, 128, %s1164, %s1132
        $region128: #{tpu_custom_call.1} parent=95 // pred_fallthru
          _
      $region96: #{tpu_custom_call.1} parent=5 // pred_fallthru
        _
      %p1167 = scmp.le.s32.totalorder 2, %s39
      // Predicated region
      $region129: #{tpu_custom_call.1} parent=5 // pred_check
        %p1168 = pneg %p1167
      $region130: #{tpu_custom_call.1} parent=5 // pred_check_branch
        %1170 = sbr.rel (%p1168) target = $region132
      $region131: #{tpu_custom_call.1} parent=5 // pred_region
        %s1171 = ssub.s32 %s39, 2
        // Predicated region
        $region133: #{tpu_custom_call.1} parent=131 // pred_check
          %p1172 = pneg %p487
        $region134: #{tpu_custom_call.1} parent=131 // pred_check_branch
          %1174 = sbr.rel (%p1172) target = $region136
        $region135: #{tpu_custom_call.1} parent=131 // pred_region
          %s1175 = sand.u32 %s472, 1
          %s1176 = scalar_lea.sflag [#allocation4], %s1175
          %s1177 = sand.u32 %s472, 1
          %s1178 = smul.addr %s1177, 8
          %s1179 = scalar_lea.vmem [#allocation11], %s1178
          %1181 = dma.done %s1176, 128
        $region136: #{tpu_custom_call.1} parent=131 // pred_fallthru
          _
        // Predicated region
        $region137: #{tpu_custom_call.1} parent=131 // pred_check
          %p1182 = pneg %p513
        $region138: #{tpu_custom_call.1} parent=131 // pred_check_branch
          %1184 = sbr.rel (%p1182) target = $region140
        $region139: #{tpu_custom_call.1} parent=131 // pred_region
          %p1185 = scmp.lt.s32.totalorder %s45, 1
          %s1186 = scalar_select %p1185, %s45, 1
          %s1187 = smul.addr %s1186, 8
          %s1188 = scalar_lea.vmem %s20, %s1187
        $region140: #{tpu_custom_call.1} parent=131 // pred_fallthru
          _
        // Predicated region
        $region141: #{tpu_custom_call.1} parent=131 // pred_check
          %p1189 = pneg %p539
        $region142: #{tpu_custom_call.1} parent=131 // pred_check_branch
          %1191 = sbr.rel (%p1189) target = $region144
        $region143: #{tpu_custom_call.1} parent=131 // pred_region
          %s1192 = sand.u32 %s524, 1
          %s1193 = scalar_lea.sflag [#allocation13], %s1192
          %s1194 = sand.u32 %s524, 1
          %s1195 = smul.addr %s1194, 8
          %s1196 = scalar_lea.vmem [#allocation12], %s1195
          %1198 = dma.done %s1193, 128
        $region144: #{tpu_custom_call.1} parent=131 // pred_fallthru
          _
      $region132: #{tpu_custom_call.1} parent=5 // pred_fallthru
        _
    $region6: #{tpu_custom_call.1} parent=1 // loop_footer
      %s43 = sadd.s32 1, %s39
    $region7: #{tpu_custom_call.1} parent=1 // loop_footer_branch
      %38 = sbr.rel target = $region3
    $region8: #{tpu_custom_call.1} parent=1 // loop_exit
      _
    %1199 = vsyncpa [#allocation3], 1
    %s1200 = scalar_lea.sflag [#allocation3], 1
    %1201 = vsyncpa %s1200, 1
    %1202 = vsyncpa [#allocation6], 1
    %1203 = vsyncpa [#allocation9], 1
    %1204 = vsyncpa [#allocation4], 1
    %s1205 = scalar_lea.sflag [#allocation4], 1
    %1206 = vsyncpa %s1205, 1
    %1207 = vsyncpa [#allocation13], 1
    %s1208 = scalar_lea.sflag [#allocation13], 1
    %1209 = vsyncpa %s1208, 1

</llo_original>
